<compile_context>
chip_gen: v7x
topology: tpu7x:2x2x1
jax: 0.10.0
libtpu: 0.0.40
codegen_flags: <defaults>
</compile_context>

<pallas_src>
import functools

import jax
import jax.numpy as jnp
from jax.experimental import pallas as pl
from jax.experimental.pallas import tpu as pltpu


def _make_row_toeplitz(conv_w, w_out):
    """Per-(co, ci, ky) horizontal Toeplitz matrices.

    conv_w: (Cout, Cin, KH, KW) float32
    Returns T of shape (Cout*Cin*KH, Wp, W_out) with
        T[(co*Cin+ci)*KH + ky, p, x] = conv_w[co, ci, ky, p - x]  if 0 <= p-x < KW else 0
    so that  x_pad_row(Wp,) @ T[idx]  is the horizontal KW-tap conv for that row.
    """
    cout, cin, kh, kw = conv_w.shape
    wp = w_out + kw - 1                      # = W + 2*pad for stride 1
    p = jnp.arange(wp)[:, None]              # (Wp, 1)
    xo = jnp.arange(w_out)[None, :]          # (1, W_out)
    kx = p - xo                              # (Wp, W_out)
    valid = (kx >= 0) & (kx < kw)
    kxc = jnp.clip(kx, 0, kw - 1)
    t = jnp.where(valid[None, None, None], conv_w[:, :, :, kxc], 0.0)
    return t.reshape(cout * cin * kh, wp, w_out).astype(jnp.float32)


def _pick_tb(batch, bytes_per_image, budget=4 << 20):
    """Largest batch tile that (a) divides B, (b) keeps ~2x-buffered blocks under a
    conservative VMEM budget, and (c) leaves >= 2 grid steps when B >= 2 so both
    v7x TensorCores get work along the 'parallel' batch axis."""
    best = 1
    for tb in range(1, batch + 1):
        if batch % tb:
            continue
        if tb * bytes_per_image * 4 > budget:
            continue
        if batch >= 2 and (batch // tb) < 2:
            continue
        best = tb
    return best


def _basic_conv_kernel(ab_ref, x_ref, t_ref, o_ref, *,
                       tb, cin, cout, kh, h_out, w_out, relu):
    # ab_ref : SMEM f32[2*Cout]  -> folded affine (a, b) per output channel
    # x_ref  : VMEM (TB, Cin, Hp, Wp)   spatially pre-padded input block
    # t_ref  : VMEM (Cout*Cin*KH, Wp, W_out) row-Toeplitz conv weights
    # o_ref  : VMEM (TB, Cout, H_out, W_out)
    for tb_i in range(tb):
        for co in range(cout):
            # Two independent accumulators -> shorter dependent add chain.
            acc0 = jnp.zeros((h_out, w_out), jnp.float32)
            acc1 = jnp.zeros((h_out, w_out), jnp.float32)
            tap = 0
            for ci in range(cin):
                xc = x_ref[tb_i, ci]                       # (Hp, Wp)
                for ky in range(kh):
                    rows = xc[ky:ky + h_out, :]            # sublane-offset slice only
                    tmat = t_ref[(co * cin + ci) * kh + ky]  # (Wp, W_out)
                    part = jnp.dot(rows, tmat,
                                   preferred_element_type=jnp.float32)  # MXU
                    if tap % 2 == 0:
                        acc0 = acc0 + part
                    else:
                        acc1 = acc1 + part
                    tap += 1
            a = ab_ref[2 * co]
            b = ab_ref[2 * co + 1]
            y = (acc0 + acc1) * a + b                      # conv + folded BN (+bias)
            if relu:
                y = jnp.maximum(y, 0.0)
            o_ref[tb_i, co] = y.astype(o_ref.dtype)


def basic_conv(x, conv_w, *, stride=1, padding=0, dilation=1, groups=1,
               bias=None, bn=None, relu=True, eps=1e-5):
    """Pallas-TPU forward of BasicConv: Conv2d (no bias by default) + BN + ReLU.

    x      : (B, Cin, H, W) float32, NCHW
    conv_w : (Cout, Cin, KH, KW) float32 (PyTorch OIHW layout)
    bn     : None or dict(gamma, beta, mean, var)  -- inference running stats
    """
    if stride != 1 or dilation != 1 or groups != 1:
        # TODO(synk): stride>1 / dilation>1 / grouped conv not implemented in this kernel.
        raise NotImplementedError("only stride=1, dilation=1, groups=1 supported")

    B, Cin, H, W = x.shape
    Cout, cin_w, KH, KW = conv_w.shape
    assert cin_w == Cin
    pad = int(padding)
    H_out = H + 2 * pad - KH + 1
    W_out = W + 2 * pad - KW + 1
    Hp, Wp = H + 2 * pad, W + 2 * pad

    # Zero-pad once in the wrapper (no per-step scratch clears inside the kernel).
    x_pad = jnp.pad(x.astype(jnp.float32),
                    ((0, 0), (0, 0), (pad, pad), (pad, pad)))

    # Horizontal conv as MXU matmuls against small row-Toeplitz matrices.
    t = _make_row_toeplitz(conv_w.astype(jnp.float32), W_out)

    # Fold conv bias + BatchNorm (inference) into y = conv * a + b.
    bias_v = jnp.zeros((Cout,), jnp.float32) if bias is None else bias.astype(jnp.float32)
    if bn is not None:
        a = bn["gamma"].astype(jnp.float32) / jnp.sqrt(bn["var"].astype(jnp.float32) + eps)
        b = bn["beta"].astype(jnp.float32) + (bias_v - bn["mean"].astype(jnp.float32)) * a
    else:
        a = jnp.ones((Cout,), jnp.float32)
        b = bias_v
    ab = jnp.stack([a, b], axis=-1).reshape(-1).astype(jnp.float32)   # [a0,b0,a1,b1,...]

    tb = _pick_tb(B, (Cin * Hp * Wp + Cout * H_out * W_out) * 4)

    kernel = functools.partial(_basic_conv_kernel, tb=tb, cin=Cin, cout=Cout,
                               kh=KH, h_out=H_out, w_out=W_out, relu=relu)

    return pl.pallas_call(
        kernel,
        out_shape=jax.ShapeDtypeStruct((B, Cout, H_out, W_out), x.dtype),
        grid=(B // tb,),
        in_specs=[
            pl.BlockSpec(memory_space=pltpu.SMEM),                         # folded affine
            pl.BlockSpec((tb, Cin, Hp, Wp), lambda i: (i, 0, 0, 0)),        # padded input
            pl.BlockSpec((Cout * Cin * KH, Wp, W_out), lambda i: (0, 0, 0)),  # Toeplitz weights
        ],
        out_specs=pl.BlockSpec((tb, Cout, H_out, W_out), lambda i: (i, 0, 0, 0)),
        compiler_params=pltpu.CompilerParams(dimension_semantics=("parallel",)),
    )(ab, x_pad, t)


def _reference(x, conv_w, *, padding, bias=None, bn=None, relu=True, eps=1e-5):
    conv = jax.lax.conv_general_dilated(
        x, conv_w, window_strides=(1, 1),
        padding=[(padding, padding), (padding, padding)],
        dimension_numbers=("NCHW", "OIHW", "NCHW"),
        precision=jax.lax.Precision.HIGHEST)
    if bias is not None:
        conv = conv + bias.reshape(1, -1, 1, 1)
    if bn is not None:
        g = bn["gamma"].reshape(1, -1, 1, 1)
        bt = bn["beta"].reshape(1, -1, 1, 1)
        m = bn["mean"].reshape(1, -1, 1, 1)
        v = bn["var"].reshape(1, -1, 1, 1)
        conv = (conv - m) / jnp.sqrt(v + eps) * g + bt
    if relu:
        conv = jnp.maximum(conv, 0.0)
    return conv


if __name__ == "__main__":
    key = jax.random.PRNGKey(0)
    k1, k2, k3, k4, k5, k6 = jax.random.split(key, 6)

    # Config 1: BasicConv(4, 2, kernel_size=3, padding=1) with defaults bn=True, relu=True, bias=False.
    B, Cin, H, W = 2, 4, 16, 16
    Cout, K = 2, 3
    x1 = jax.random.normal(k1, (B, Cin, H, W), jnp.float32)
    w1 = jax.random.normal(k2, (Cout, Cin, K, K), jnp.float32) * 0.1
    bn1 = dict(
        gamma=1.0 + 0.1 * jax.random.normal(k3, (Cout,), jnp.float32),
        beta=0.1 * jax.random.normal(k4, (Cout,), jnp.float32),
        mean=0.05 * jax.random.normal(k5, (Cout,), jnp.float32),
        var=0.5 + jnp.abs(jax.random.normal(k6, (Cout,), jnp.float32)) * 0.2,
    )
    out1 = jax.block_until_ready(basic_conv(x1, w1, padding=1, bn=bn1, relu=True))
    ref1 = _reference(x1, w1, padding=1, bn=bn1, relu=True)
    assert out1.shape == ref1.shape
    err1 = float(jnp.max(jnp.abs(out1 - ref1)))
    assert jnp.allclose(out1, ref1, rtol=1e-4, atol=1e-4), err1

    # Config 2: BasicConv(2, 1, kernel_size=7, stride=1, padding=3, relu=False)
    # -- the instantiation used inside UNet_SETA's attention block.
    x2 = jax.random.normal(k4, (B, 2, H, W), jnp.float32)
    w2 = jax.random.normal(k5, (1, 2, 7, 7), jnp.float32) * 0.1
    bn2 = dict(gamma=jnp.ones((1,), jnp.float32), beta=jnp.zeros((1,), jnp.float32),
               mean=jnp.zeros((1,), jnp.float32), var=jnp.ones((1,), jnp.float32))
    out2 = jax.block_until_ready(basic_conv(x2, w2, padding=3, bn=bn2, relu=False))
    ref2 = _reference(x2, w2, padding=3, bn=bn2, relu=False)
    assert out2.shape == ref2.shape
    err2 = float(jnp.max(jnp.abs(out2 - ref2)))
    assert jnp.allclose(out2, ref2, rtol=1e-4, atol=1e-4), err2

    print("KERNEL_OK")
</pallas_src>

<mosaic_0001>
module attributes {stable_mosaic.version = 11 : i64} {
  func.func @_basic_conv_kernel(%arg0: i32, %arg1: memref<4xf32, #tpu.memory_space<smem>>, %arg2: memref<1x4x18x18xf32, #tpu.memory_space<vmem>>, %arg3: memref<24x18x16xf32, #tpu.memory_space<vmem>>, %arg4: memref<1x2x16x16xf32, #tpu.memory_space<vmem>>) attributes {dimension_semantics = [#tpu.dimension_semantics<parallel>], iteration_bounds = array<i64: 2>, scalar_prefetch = 0 : i64, scratch_operands = 0 : i64, tpu.core_type = #tpu.core_type<tc>, window_params = [{transform_indices = @transform_0, window_bounds = array<i64: 4>}, {transform_indices = @transform_1, window_bounds = array<i64: 1, 4, 18, 18>}, {pipeline_mode = #tpu.pipeline_mode<synchronous>, transform_indices = @transform_2, window_bounds = array<i64: 24, 18, 16>}, {transform_indices = @transform_3, window_bounds = array<i64: 1, 2, 16, 16>}]} {
    %cst = arith.constant 0.000000e+00 : f32
    %0 = vector.broadcast %cst : f32 to vector<16x16xf32>
    %cst_0 = arith.constant 0.000000e+00 : f32
    %1 = vector.broadcast %cst_0 : f32 to vector<16x16xf32>
    %c0 = arith.constant 0 : index
    %c0_1 = arith.constant 0 : index
    %c0_2 = arith.constant 0 : index
    %c0_3 = arith.constant 0 : index
    %2 = vector.load %arg2[%c0, %c0_1, %c0_2, %c0_3] : memref<1x4x18x18xf32, #tpu.memory_space<vmem>>, vector<1x1x18x18xf32>
    %3 = vector.shape_cast %2 : vector<1x1x18x18xf32> to vector<18x18xf32>
    %4 = vector.extract_strided_slice %3 {offsets = [0, 0], sizes = [16, 18], strides = [1, 1]} : vector<18x18xf32> to vector<16x18xf32>
    %c0_4 = arith.constant 0 : index
    %c0_5 = arith.constant 0 : index
    %c0_6 = arith.constant 0 : index
    %5 = vector.load %arg3[%c0_4, %c0_5, %c0_6] : memref<24x18x16xf32, #tpu.memory_space<vmem>>, vector<1x18x16xf32>
    %6 = vector.shape_cast %5 : vector<1x18x16xf32> to vector<18x16xf32>
    %cst_7 = arith.constant dense<0.000000e+00> : vector<16x16xf32>
    %7 = tpu.matmul %4, %6, %cst_7 {dimension_numbers = #tpu.dot_dimension_numbers<[1], [0], [0], [1], [0, 0, 1, 1], [], []>} : vector<16x18xf32>, vector<18x16xf32>, vector<16x16xf32> -> vector<16x16xf32>
    %8 = arith.addf %0, %7 : vector<16x16xf32>
    %9 = vector.extract_strided_slice %3 {offsets = [1, 0], sizes = [16, 18], strides = [1, 1]} : vector<18x18xf32> to vector<16x18xf32>
    %c1 = arith.constant 1 : index
    %c0_8 = arith.constant 0 : index
    %c0_9 = arith.constant 0 : index
    %10 = vector.load %arg3[%c1, %c0_8, %c0_9] : memref<24x18x16xf32, #tpu.memory_space<vmem>>, vector<1x18x16xf32>
    %11 = vector.shape_cast %10 : vector<1x18x16xf32> to vector<18x16xf32>
    %cst_10 = arith.constant dense<0.000000e+00> : vector<16x16xf32>
    %12 = tpu.matmul %9, %11, %cst_10 {dimension_numbers = #tpu.dot_dimension_numbers<[1], [0], [0], [1], [0, 0, 1, 1], [], []>} : vector<16x18xf32>, vector<18x16xf32>, vector<16x16xf32> -> vector<16x16xf32>
    %13 = arith.addf %1, %12 : vector<16x16xf32>
    %14 = vector.extract_strided_slice %3 {offsets = [2, 0], sizes = [16, 18], strides = [1, 1]} : vector<18x18xf32> to vector<16x18xf32>
    %c2 = arith.constant 2 : index
    %c0_11 = arith.constant 0 : index
    %c0_12 = arith.constant 0 : index
    %15 = vector.load %arg3[%c2, %c0_11, %c0_12] : memref<24x18x16xf32, #tpu.memory_space<vmem>>, vector<1x18x16xf32>
    %16 = vector.shape_cast %15 : vector<1x18x16xf32> to vector<18x16xf32>
    %cst_13 = arith.constant dense<0.000000e+00> : vector<16x16xf32>
    %17 = tpu.matmul %14, %16, %cst_13 {dimension_numbers = #tpu.dot_dimension_numbers<[1], [0], [0], [1], [0, 0, 1, 1], [], []>} : vector<16x18xf32>, vector<18x16xf32>, vector<16x16xf32> -> vector<16x16xf32>
    %18 = arith.addf %8, %17 : vector<16x16xf32>
    %c0_14 = arith.constant 0 : index
    %c1_15 = arith.constant 1 : index
    %c0_16 = arith.constant 0 : index
    %c0_17 = arith.constant 0 : index
    %19 = vector.load %arg2[%c0_14, %c1_15, %c0_16, %c0_17] : memref<1x4x18x18xf32, #tpu.memory_space<vmem>>, vector<1x1x18x18xf32>
    %20 = vector.shape_cast %19 : vector<1x1x18x18xf32> to vector<18x18xf32>
    %21 = vector.extract_strided_slice %20 {offsets = [0, 0], sizes = [16, 18], strides = [1, 1]} : vector<18x18xf32> to vector<16x18xf32>
    %c3 = arith.constant 3 : index
    %c0_18 = arith.constant 0 : index
    %c0_19 = arith.constant 0 : index
    %22 = vector.load %arg3[%c3, %c0_18, %c0_19] : memref<24x18x16xf32, #tpu.memory_space<vmem>>, vector<1x18x16xf32>
    %23 = vector.shape_cast %22 : vector<1x18x16xf32> to vector<18x16xf32>
    %cst_20 = arith.constant dense<0.000000e+00> : vector<16x16xf32>
    %24 = tpu.matmul %21, %23, %cst_20 {dimension_numbers = #tpu.dot_dimension_numbers<[1], [0], [0], [1], [0, 0, 1, 1], [], []>} : vector<16x18xf32>, vector<18x16xf32>, vector<16x16xf32> -> vector<16x16xf32>
    %25 = arith.addf %13, %24 : vector<16x16xf32>
    %26 = vector.extract_strided_slice %20 {offsets = [1, 0], sizes = [16, 18], strides = [1, 1]} : vector<18x18xf32> to vector<16x18xf32>
    %c4 = arith.constant 4 : index
    %c0_21 = arith.constant 0 : index
    %c0_22 = arith.constant 0 : index
    %27 = vector.load %arg3[%c4, %c0_21, %c0_22] : memref<24x18x16xf32, #tpu.memory_space<vmem>>, vector<1x18x16xf32>
    %28 = vector.shape_cast %27 : vector<1x18x16xf32> to vector<18x16xf32>
    %cst_23 = arith.constant dense<0.000000e+00> : vector<16x16xf32>
    %29 = tpu.matmul %26, %28, %cst_23 {dimension_numbers = #tpu.dot_dimension_numbers<[1], [0], [0], [1], [0, 0, 1, 1], [], []>} : vector<16x18xf32>, vector<18x16xf32>, vector<16x16xf32> -> vector<16x16xf32>
    %30 = arith.addf %18, %29 : vector<16x16xf32>
    %31 = vector.extract_strided_slice %20 {offsets = [2, 0], sizes = [16, 18], strides = [1, 1]} : vector<18x18xf32> to vector<16x18xf32>
    %c5 = arith.constant 5 : index
    %c0_24 = arith.constant 0 : index
    %c0_25 = arith.constant 0 : index
    %32 = vector.load %arg3[%c5, %c0_24, %c0_25] : memref<24x18x16xf32, #tpu.memory_space<vmem>>, vector<1x18x16xf32>
    %33 = vector.shape_cast %32 : vector<1x18x16xf32> to vector<18x16xf32>
    %cst_26 = arith.constant dense<0.000000e+00> : vector<16x16xf32>
    %34 = tpu.matmul %31, %33, %cst_26 {dimension_numbers = #tpu.dot_dimension_numbers<[1], [0], [0], [1], [0, 0, 1, 1], [], []>} : vector<16x18xf32>, vector<18x16xf32>, vector<16x16xf32> -> vector<16x16xf32>
    %35 = arith.addf %25, %34 : vector<16x16xf32>
    %c0_27 = arith.constant 0 : index
    %c2_28 = arith.constant 2 : index
    %c0_29 = arith.constant 0 : index
    %c0_30 = arith.constant 0 : index
    %36 = vector.load %arg2[%c0_27, %c2_28, %c0_29, %c0_30] : memref<1x4x18x18xf32, #tpu.memory_space<vmem>>, vector<1x1x18x18xf32>
    %37 = vector.shape_cast %36 : vector<1x1x18x18xf32> to vector<18x18xf32>
    %38 = vector.extract_strided_slice %37 {offsets = [0, 0], sizes = [16, 18], strides = [1, 1]} : vector<18x18xf32> to vector<16x18xf32>
    %c6 = arith.constant 6 : index
    %c0_31 = arith.constant 0 : index
    %c0_32 = arith.constant 0 : index
    %39 = vector.load %arg3[%c6, %c0_31, %c0_32] : memref<24x18x16xf32, #tpu.memory_space<vmem>>, vector<1x18x16xf32>
    %40 = vector.shape_cast %39 : vector<1x18x16xf32> to vector<18x16xf32>
    %cst_33 = arith.constant dense<0.000000e+00> : vector<16x16xf32>
    %41 = tpu.matmul %38, %40, %cst_33 {dimension_numbers = #tpu.dot_dimension_numbers<[1], [0], [0], [1], [0, 0, 1, 1], [], []>} : vector<16x18xf32>, vector<18x16xf32>, vector<16x16xf32> -> vector<16x16xf32>
    %42 = arith.addf %30, %41 : vector<16x16xf32>
    %43 = vector.extract_strided_slice %37 {offsets = [1, 0], sizes = [16, 18], strides = [1, 1]} : vector<18x18xf32> to vector<16x18xf32>
    %c7 = arith.constant 7 : index
    %c0_34 = arith.constant 0 : index
    %c0_35 = arith.constant 0 : index
    %44 = vector.load %arg3[%c7, %c0_34, %c0_35] : memref<24x18x16xf32, #tpu.memory_space<vmem>>, vector<1x18x16xf32>
    %45 = vector.shape_cast %44 : vector<1x18x16xf32> to vector<18x16xf32>
    %cst_36 = arith.constant dense<0.000000e+00> : vector<16x16xf32>
    %46 = tpu.matmul %43, %45, %cst_36 {dimension_numbers = #tpu.dot_dimension_numbers<[1], [0], [0], [1], [0, 0, 1, 1], [], []>} : vector<16x18xf32>, vector<18x16xf32>, vector<16x16xf32> -> vector<16x16xf32>
    %47 = arith.addf %35, %46 : vector<16x16xf32>
    %48 = vector.extract_strided_slice %37 {offsets = [2, 0], sizes = [16, 18], strides = [1, 1]} : vector<18x18xf32> to vector<16x18xf32>
    %c8 = arith.constant 8 : index
    %c0_37 = arith.constant 0 : index
    %c0_38 = arith.constant 0 : index
    %49 = vector.load %arg3[%c8, %c0_37, %c0_38] : memref<24x18x16xf32, #tpu.memory_space<vmem>>, vector<1x18x16xf32>
    %50 = vector.shape_cast %49 : vector<1x18x16xf32> to vector<18x16xf32>
    %cst_39 = arith.constant dense<0.000000e+00> : vector<16x16xf32>
    %51 = tpu.matmul %48, %50, %cst_39 {dimension_numbers = #tpu.dot_dimension_numbers<[1], [0], [0], [1], [0, 0, 1, 1], [], []>} : vector<16x18xf32>, vector<18x16xf32>, vector<16x16xf32> -> vector<16x16xf32>
    %52 = arith.addf %42, %51 : vector<16x16xf32>
    %c0_40 = arith.constant 0 : index
    %c3_41 = arith.constant 3 : index
    %c0_42 = arith.constant 0 : index
    %c0_43 = arith.constant 0 : index
    %53 = vector.load %arg2[%c0_40, %c3_41, %c0_42, %c0_43] : memref<1x4x18x18xf32, #tpu.memory_space<vmem>>, vector<1x1x18x18xf32>
    %54 = vector.shape_cast %53 : vector<1x1x18x18xf32> to vector<18x18xf32>
    %55 = vector.extract_strided_slice %54 {offsets = [0, 0], sizes = [16, 18], strides = [1, 1]} : vector<18x18xf32> to vector<16x18xf32>
    %c9 = arith.constant 9 : index
    %c0_44 = arith.constant 0 : index
    %c0_45 = arith.constant 0 : index
    %56 = vector.load %arg3[%c9, %c0_44, %c0_45] : memref<24x18x16xf32, #tpu.memory_space<vmem>>, vector<1x18x16xf32>
    %57 = vector.shape_cast %56 : vector<1x18x16xf32> to vector<18x16xf32>
    %cst_46 = arith.constant dense<0.000000e+00> : vector<16x16xf32>
    %58 = tpu.matmul %55, %57, %cst_46 {dimension_numbers = #tpu.dot_dimension_numbers<[1], [0], [0], [1], [0, 0, 1, 1], [], []>} : vector<16x18xf32>, vector<18x16xf32>, vector<16x16xf32> -> vector<16x16xf32>
    %59 = arith.addf %47, %58 : vector<16x16xf32>
    %60 = vector.extract_strided_slice %54 {offsets = [1, 0], sizes = [16, 18], strides = [1, 1]} : vector<18x18xf32> to vector<16x18xf32>
    %c10 = arith.constant 10 : index
    %c0_47 = arith.constant 0 : index
    %c0_48 = arith.constant 0 : index
    %61 = vector.load %arg3[%c10, %c0_47, %c0_48] : memref<24x18x16xf32, #tpu.memory_space<vmem>>, vector<1x18x16xf32>
    %62 = vector.shape_cast %61 : vector<1x18x16xf32> to vector<18x16xf32>
    %cst_49 = arith.constant dense<0.000000e+00> : vector<16x16xf32>
    %63 = tpu.matmul %60, %62, %cst_49 {dimension_numbers = #tpu.dot_dimension_numbers<[1], [0], [0], [1], [0, 0, 1, 1], [], []>} : vector<16x18xf32>, vector<18x16xf32>, vector<16x16xf32> -> vector<16x16xf32>
    %64 = arith.addf %52, %63 : vector<16x16xf32>
    %65 = vector.extract_strided_slice %54 {offsets = [2, 0], sizes = [16, 18], strides = [1, 1]} : vector<18x18xf32> to vector<16x18xf32>
    %c11 = arith.constant 11 : index
    %c0_50 = arith.constant 0 : index
    %c0_51 = arith.constant 0 : index
    %66 = vector.load %arg3[%c11, %c0_50, %c0_51] : memref<24x18x16xf32, #tpu.memory_space<vmem>>, vector<1x18x16xf32>
    %67 = vector.shape_cast %66 : vector<1x18x16xf32> to vector<18x16xf32>
    %cst_52 = arith.constant dense<0.000000e+00> : vector<16x16xf32>
    %68 = tpu.matmul %65, %67, %cst_52 {dimension_numbers = #tpu.dot_dimension_numbers<[1], [0], [0], [1], [0, 0, 1, 1], [], []>} : vector<16x18xf32>, vector<18x16xf32>, vector<16x16xf32> -> vector<16x16xf32>
    %69 = arith.addf %59, %68 : vector<16x16xf32>
    %c0_53 = arith.constant 0 : index
    %70 = memref.load %arg1[%c0_53] : memref<4xf32, #tpu.memory_space<smem>>
    %c1_54 = arith.constant 1 : index
    %71 = memref.load %arg1[%c1_54] : memref<4xf32, #tpu.memory_space<smem>>
    %72 = arith.addf %64, %69 : vector<16x16xf32>
    %73 = vector.broadcast %70 : f32 to vector<16x16xf32>
    %74 = arith.mulf %72, %73 : vector<16x16xf32>
    %75 = vector.broadcast %71 : f32 to vector<16x16xf32>
    %76 = arith.addf %74, %75 : vector<16x16xf32>
    %cst_55 = arith.constant 0.000000e+00 : f32
    %77 = vector.broadcast %cst_55 : f32 to vector<16x16xf32>
    %78 = arith.maximumf %76, %77 : vector<16x16xf32>
    %c0_56 = arith.constant 0 : index
    %c0_57 = arith.constant 0 : index
    %c0_58 = arith.constant 0 : index
    %c0_59 = arith.constant 0 : index
    %79 = vector.load %arg4[%c0_56, %c0_57, %c0_58, %c0_59] : memref<1x2x16x16xf32, #tpu.memory_space<vmem>>, vector<1x1x16x16xf32>
    %80 = vector.shape_cast %79 : vector<1x1x16x16xf32> to vector<16x16xf32>
    %81 = vector.shape_cast %78 : vector<16x16xf32> to vector<1x1x16x16xf32>
    tpu.vector_store %arg4[%c0_56, %c0_57, %c0_58, %c0_59], %81 {strides = array<i32>} : memref<1x2x16x16xf32, #tpu.memory_space<vmem>>, vector<1x1x16x16xf32>,
    %cst_60 = arith.constant 0.000000e+00 : f32
    %82 = vector.broadcast %cst_60 : f32 to vector<16x16xf32>
    %cst_61 = arith.constant 0.000000e+00 : f32
    %83 = vector.broadcast %cst_61 : f32 to vector<16x16xf32>
    %c0_62 = arith.constant 0 : index
    %c0_63 = arith.constant 0 : index
    %c0_64 = arith.constant 0 : index
    %c0_65 = arith.constant 0 : index
    %84 = vector.load %arg2[%c0_62, %c0_63, %c0_64, %c0_65] : memref<1x4x18x18xf32, #tpu.memory_space<vmem>>, vector<1x1x18x18xf32>
    %85 = vector.shape_cast %84 : vector<1x1x18x18xf32> to vector<18x18xf32>
    %86 = vector.extract_strided_slice %85 {offsets = [0, 0], sizes = [16, 18], strides = [1, 1]} : vector<18x18xf32> to vector<16x18xf32>
    %c12 = arith.constant 12 : index
    %c0_66 = arith.constant 0 : index
    %c0_67 = arith.constant 0 : index
    %87 = vector.load %arg3[%c12, %c0_66, %c0_67] : memref<24x18x16xf32, #tpu.memory_space<vmem>>, vector<1x18x16xf32>
    %88 = vector.shape_cast %87 : vector<1x18x16xf32> to vector<18x16xf32>
    %cst_68 = arith.constant dense<0.000000e+00> : vector<16x16xf32>
    %89 = tpu.matmul %86, %88, %cst_68 {dimension_numbers = #tpu.dot_dimension_numbers<[1], [0], [0], [1], [0, 0, 1, 1], [], []>} : vector<16x18xf32>, vector<18x16xf32>, vector<16x16xf32> -> vector<16x16xf32>
    %90 = arith.addf %82, %89 : vector<16x16xf32>
    %91 = vector.extract_strided_slice %85 {offsets = [1, 0], sizes = [16, 18], strides = [1, 1]} : vector<18x18xf32> to vector<16x18xf32>
    %c13 = arith.constant 13 : index
    %c0_69 = arith.constant 0 : index
    %c0_70 = arith.constant 0 : index
    %92 = vector.load %arg3[%c13, %c0_69, %c0_70] : memref<24x18x16xf32, #tpu.memory_space<vmem>>, vector<1x18x16xf32>
    %93 = vector.shape_cast %92 : vector<1x18x16xf32> to vector<18x16xf32>
    %cst_71 = arith.constant dense<0.000000e+00> : vector<16x16xf32>
    %94 = tpu.matmul %91, %93, %cst_71 {dimension_numbers = #tpu.dot_dimension_numbers<[1], [0], [0], [1], [0, 0, 1, 1], [], []>} : vector<16x18xf32>, vector<18x16xf32>, vector<16x16xf32> -> vector<16x16xf32>
    %95 = arith.addf %83, %94 : vector<16x16xf32>
    %96 = vector.extract_strided_slice %85 {offsets = [2, 0], sizes = [16, 18], strides = [1, 1]} : vector<18x18xf32> to vector<16x18xf32>
    %c14 = arith.constant 14 : index
    %c0_72 = arith.constant 0 : index
    %c0_73 = arith.constant 0 : index
    %97 = vector.load %arg3[%c14, %c0_72, %c0_73] : memref<24x18x16xf32, #tpu.memory_space<vmem>>, vector<1x18x16xf32>
    %98 = vector.shape_cast %97 : vector<1x18x16xf32> to vector<18x16xf32>
    %cst_74 = arith.constant dense<0.000000e+00> : vector<16x16xf32>
    %99 = tpu.matmul %96, %98, %cst_74 {dimension_numbers = #tpu.dot_dimension_numbers<[1], [0], [0], [1], [0, 0, 1, 1], [], []>} : vector<16x18xf32>, vector<18x16xf32>, vector<16x16xf32> -> vector<16x16xf32>
    %100 = arith.addf %90, %99 : vector<16x16xf32>
    %c0_75 = arith.constant 0 : index
    %c1_76 = arith.constant 1 : index
    %c0_77 = arith.constant 0 : index
    %c0_78 = arith.constant 0 : index
    %101 = vector.load %arg2[%c0_75, %c1_76, %c0_77, %c0_78] : memref<1x4x18x18xf32, #tpu.memory_space<vmem>>, vector<1x1x18x18xf32>
    %102 = vector.shape_cast %101 : vector<1x1x18x18xf32> to vector<18x18xf32>
    %103 = vector.extract_strided_slice %102 {offsets = [0, 0], sizes = [16, 18], strides = [1, 1]} : vector<18x18xf32> to vector<16x18xf32>
    %c15 = arith.constant 15 : index
    %c0_79 = arith.constant 0 : index
    %c0_80 = arith.constant 0 : index
    %104 = vector.load %arg3[%c15, %c0_79, %c0_80] : memref<24x18x16xf32, #tpu.memory_space<vmem>>, vector<1x18x16xf32>
    %105 = vector.shape_cast %104 : vector<1x18x16xf32> to vector<18x16xf32>
    %cst_81 = arith.constant dense<0.000000e+00> : vector<16x16xf32>
    %106 = tpu.matmul %103, %105, %cst_81 {dimension_numbers = #tpu.dot_dimension_numbers<[1], [0], [0], [1], [0, 0, 1, 1], [], []>} : vector<16x18xf32>, vector<18x16xf32>, vector<16x16xf32> -> vector<16x16xf32>
    %107 = arith.addf %95, %106 : vector<16x16xf32>
    %108 = vector.extract_strided_slice %102 {offsets = [1, 0], sizes = [16, 18], strides = [1, 1]} : vector<18x18xf32> to vector<16x18xf32>
    %c16 = arith.constant 16 : index
    %c0_82 = arith.constant 0 : index
    %c0_83 = arith.constant 0 : index
    %109 = vector.load %arg3[%c16, %c0_82, %c0_83] : memref<24x18x16xf32, #tpu.memory_space<vmem>>, vector<1x18x16xf32>
    %110 = vector.shape_cast %109 : vector<1x18x16xf32> to vector<18x16xf32>
    %cst_84 = arith.constant dense<0.000000e+00> : vector<16x16xf32>
    %111 = tpu.matmul %108, %110, %cst_84 {dimension_numbers = #tpu.dot_dimension_numbers<[1], [0], [0], [1], [0, 0, 1, 1], [], []>} : vector<16x18xf32>, vector<18x16xf32>, vector<16x16xf32> -> vector<16x16xf32>
    %112 = arith.addf %100, %111 : vector<16x16xf32>
    %113 = vector.extract_strided_slice %102 {offsets = [2, 0], sizes = [16, 18], strides = [1, 1]} : vector<18x18xf32> to vector<16x18xf32>
    %c17 = arith.constant 17 : index
    %c0_85 = arith.constant 0 : index
    %c0_86 = arith.constant 0 : index
    %114 = vector.load %arg3[%c17, %c0_85, %c0_86] : memref<24x18x16xf32, #tpu.memory_space<vmem>>, vector<1x18x16xf32>
    %115 = vector.shape_cast %114 : vector<1x18x16xf32> to vector<18x16xf32>
    %cst_87 = arith.constant dense<0.000000e+00> : vector<16x16xf32>
    %116 = tpu.matmul %113, %115, %cst_87 {dimension_numbers = #tpu.dot_dimension_numbers<[1], [0], [0], [1], [0, 0, 1, 1], [], []>} : vector<16x18xf32>, vector<18x16xf32>, vector<16x16xf32> -> vector<16x16xf32>
    %117 = arith.addf %107, %116 : vector<16x16xf32>
    %c0_88 = arith.constant 0 : index
    %c2_89 = arith.constant 2 : index
    %c0_90 = arith.constant 0 : index
    %c0_91 = arith.constant 0 : index
    %118 = vector.load %arg2[%c0_88, %c2_89, %c0_90, %c0_91] : memref<1x4x18x18xf32, #tpu.memory_space<vmem>>, vector<1x1x18x18xf32>
    %119 = vector.shape_cast %118 : vector<1x1x18x18xf32> to vector<18x18xf32>
    %120 = vector.extract_strided_slice %119 {offsets = [0, 0], sizes = [16, 18], strides = [1, 1]} : vector<18x18xf32> to vector<16x18xf32>
    %c18 = arith.constant 18 : index
    %c0_92 = arith.constant 0 : index
    %c0_93 = arith.constant 0 : index
    %121 = vector.load %arg3[%c18, %c0_92, %c0_93] : memref<24x18x16xf32, #tpu.memory_space<vmem>>, vector<1x18x16xf32>
    %122 = vector.shape_cast %121 : vector<1x18x16xf32> to vector<18x16xf32>
    %cst_94 = arith.constant dense<0.000000e+00> : vector<16x16xf32>
    %123 = tpu.matmul %120, %122, %cst_94 {dimension_numbers = #tpu.dot_dimension_numbers<[1], [0], [0], [1], [0, 0, 1, 1], [], []>} : vector<16x18xf32>, vector<18x16xf32>, vector<16x16xf32> -> vector<16x16xf32>
    %124 = arith.addf %112, %123 : vector<16x16xf32>
    %125 = vector.extract_strided_slice %119 {offsets = [1, 0], sizes = [16, 18], strides = [1, 1]} : vector<18x18xf32> to vector<16x18xf32>
    %c19 = arith.constant 19 : index
    %c0_95 = arith.constant 0 : index
    %c0_96 = arith.constant 0 : index
    %126 = vector.load %arg3[%c19, %c0_95, %c0_96] : memref<24x18x16xf32, #tpu.memory_space<vmem>>, vector<1x18x16xf32>
    %127 = vector.shape_cast %126 : vector<1x18x16xf32> to vector<18x16xf32>
    %cst_97 = arith.constant dense<0.000000e+00> : vector<16x16xf32>
    %128 = tpu.matmul %125, %127, %cst_97 {dimension_numbers = #tpu.dot_dimension_numbers<[1], [0], [0], [1], [0, 0, 1, 1], [], []>} : vector<16x18xf32>, vector<18x16xf32>, vector<16x16xf32> -> vector<16x16xf32>
    %129 = arith.addf %117, %128 : vector<16x16xf32>
    %130 = vector.extract_strided_slice %119 {offsets = [2, 0], sizes = [16, 18], strides = [1, 1]} : vector<18x18xf32> to vector<16x18xf32>
    %c20 = arith.constant 20 : index
    %c0_98 = arith.constant 0 : index
    %c0_99 = arith.constant 0 : index
    %131 = vector.load %arg3[%c20, %c0_98, %c0_99] : memref<24x18x16xf32, #tpu.memory_space<vmem>>, vector<1x18x16xf32>
    %132 = vector.shape_cast %131 : vector<1x18x16xf32> to vector<18x16xf32>
    %cst_100 = arith.constant dense<0.000000e+00> : vector<16x16xf32>
    %133 = tpu.matmul %130, %132, %cst_100 {dimension_numbers = #tpu.dot_dimension_numbers<[1], [0], [0], [1], [0, 0, 1, 1], [], []>} : vector<16x18xf32>, vector<18x16xf32>, vector<16x16xf32> -> vector<16x16xf32>
    %134 = arith.addf %124, %133 : vector<16x16xf32>
    %c0_101 = arith.constant 0 : index
    %c3_102 = arith.constant 3 : index
    %c0_103 = arith.constant 0 : index
    %c0_104 = arith.constant 0 : index
    %135 = vector.load %arg2[%c0_101, %c3_102, %c0_103, %c0_104] : memref<1x4x18x18xf32, #tpu.memory_space<vmem>>, vector<1x1x18x18xf32>
    %136 = vector.shape_cast %135 : vector<1x1x18x18xf32> to vector<18x18xf32>
    %137 = vector.extract_strided_slice %136 {offsets = [0, 0], sizes = [16, 18], strides = [1, 1]} : vector<18x18xf32> to vector<16x18xf32>
    %c21 = arith.constant 21 : index
    %c0_105 = arith.constant 0 : index
    %c0_106 = arith.constant 0 : index
    %138 = vector.load %arg3[%c21, %c0_105, %c0_106] : memref<24x18x16xf32, #tpu.memory_space<vmem>>, vector<1x18x16xf32>
    %139 = vector.shape_cast %138 : vector<1x18x16xf32> to vector<18x16xf32>
    %cst_107 = arith.constant dense<0.000000e+00> : vector<16x16xf32>
    %140 = tpu.matmul %137, %139, %cst_107 {dimension_numbers = #tpu.dot_dimension_numbers<[1], [0], [0], [1], [0, 0, 1, 1], [], []>} : vector<16x18xf32>, vector<18x16xf32>, vector<16x16xf32> -> vector<16x16xf32>
    %141 = arith.addf %129, %140 : vector<16x16xf32>
    %142 = vector.extract_strided_slice %136 {offsets = [1, 0], sizes = [16, 18], strides = [1, 1]} : vector<18x18xf32> to vector<16x18xf32>
    %c22 = arith.constant 22 : index
    %c0_108 = arith.constant 0 : index
    %c0_109 = arith.constant 0 : index
    %143 = vector.load %arg3[%c22, %c0_108, %c0_109] : memref<24x18x16xf32, #tpu.memory_space<vmem>>, vector<1x18x16xf32>
    %144 = vector.shape_cast %143 : vector<1x18x16xf32> to vector<18x16xf32>
    %cst_110 = arith.constant dense<0.000000e+00> : vector<16x16xf32>
    %145 = tpu.matmul %142, %144, %cst_110 {dimension_numbers = #tpu.dot_dimension_numbers<[1], [0], [0], [1], [0, 0, 1, 1], [], []>} : vector<16x18xf32>, vector<18x16xf32>, vector<16x16xf32> -> vector<16x16xf32>
    %146 = arith.addf %134, %145 : vector<16x16xf32>
    %147 = vector.extract_strided_slice %136 {offsets = [2, 0], sizes = [16, 18], strides = [1, 1]} : vector<18x18xf32> to vector<16x18xf32>
    %c23 = arith.constant 23 : index
    %c0_111 = arith.constant 0 : index
    %c0_112 = arith.constant 0 : index
    %148 = vector.load %arg3[%c23, %c0_111, %c0_112] : memref<24x18x16xf32, #tpu.memory_space<vmem>>, vector<1x18x16xf32>
    %149 = vector.shape_cast %148 : vector<1x18x16xf32> to vector<18x16xf32>
    %cst_113 = arith.constant dense<0.000000e+00> : vector<16x16xf32>
    %150 = tpu.matmul %147, %149, %cst_113 {dimension_numbers = #tpu.dot_dimension_numbers<[1], [0], [0], [1], [0, 0, 1, 1], [], []>} : vector<16x18xf32>, vector<18x16xf32>, vector<16x16xf32> -> vector<16x16xf32>
    %151 = arith.addf %141, %150 : vector<16x16xf32>
    %c2_114 = arith.constant 2 : index
    %152 = memref.load %arg1[%c2_114] : memref<4xf32, #tpu.memory_space<smem>>
    %c3_115 = arith.constant 3 : index
    %153 = memref.load %arg1[%c3_115] : memref<4xf32, #tpu.memory_space<smem>>
    %154 = arith.addf %146, %151 : vector<16x16xf32>
    %155 = vector.broadcast %152 : f32 to vector<16x16xf32>
    %156 = arith.mulf %154, %155 : vector<16x16xf32>
    %157 = vector.broadcast %153 : f32 to vector<16x16xf32>
    %158 = arith.addf %156, %157 : vector<16x16xf32>
    %cst_116 = arith.constant 0.000000e+00 : f32
    %159 = vector.broadcast %cst_116 : f32 to vector<16x16xf32>
    %160 = arith.maximumf %158, %159 : vector<16x16xf32>
    %c0_117 = arith.constant 0 : index
    %c1_118 = arith.constant 1 : index
    %c0_119 = arith.constant 0 : index
    %c0_120 = arith.constant 0 : index
    %161 = vector.load %arg4[%c0_117, %c1_118, %c0_119, %c0_120] : memref<1x2x16x16xf32, #tpu.memory_space<vmem>>, vector<1x1x16x16xf32>
    %162 = vector.shape_cast %161 : vector<1x1x16x16xf32> to vector<16x16xf32>
    %163 = vector.shape_cast %160 : vector<16x16xf32> to vector<1x1x16x16xf32>
    tpu.vector_store %arg4[%c0_117, %c1_118, %c0_119, %c0_120], %163 {strides = array<i32>} : memref<1x2x16x16xf32, #tpu.memory_space<vmem>>, vector<1x1x16x16xf32>,
    return
  }
  func.func @transform_0(%arg0: i32) -> i32 {
    %c0_i32 = arith.constant 0 : i32
    %c0_i32_0 = arith.constant 0 : i32
    return %c0_i32 : i32
  }
  func.func @transform_1(%arg0: i32) -> (i32, i32, i32, i32) {
    %c0_i32 = arith.constant 0 : i32
    %c0_i32_0 = arith.constant 0 : i32
    %c0_i32_1 = arith.constant 0 : i32
    %c0_i32_2 = arith.constant 0 : i32
    return %arg0, %c0_i32, %c0_i32_0, %c0_i32_1 : i32, i32, i32, i32
  }
  func.func @transform_2(%arg0: i32) -> (i32, i32, i32) {
    %c0_i32 = arith.constant 0 : i32
    %c0_i32_0 = arith.constant 0 : i32
    %c0_i32_1 = arith.constant 0 : i32
    %c0_i32_2 = arith.constant 0 : i32
    return %c0_i32, %c0_i32_0, %c0_i32_1 : i32, i32, i32
  }
  func.func @transform_3(%arg0: i32) -> (i32, i32, i32, i32) {
    %c0_i32 = arith.constant 0 : i32
    %c0_i32_0 = arith.constant 0 : i32
    %c0_i32_1 = arith.constant 0 : i32
    %c0_i32_2 = arith.constant 0 : i32
    return %arg0, %c0_i32, %c0_i32_0, %c0_i32_1 : i32, i32, i32, i32
  }
}

</mosaic_0001>

<llo_original>
// kernel: tpu_custom_call.1
$region0: #{tpu_custom_call.1}
  #allocation0 [shape = 'u32[]', space=smem, size = 0x4, offset = 0x4, fixed_abs, tag = 'smem constant byte address 0x4 - core index']
  #allocation1 [shape = 'u32[144,128]{1,0:T(1,128)}', space=vmem, size = 0x12000, scoped, tag = 'internal scratch']
  %s0 = inlined_call_operand.vmem [shape: f32[4], index: 0, kind: input, shape index: {}]
  %s1 = inlined_call_operand.vmem [shape: f32[2,4,18,18], index: 1, kind: input, shape index: {}]
  %s2 = inlined_call_operand.vmem [shape: f32[24,18,16], index: 2, kind: input, shape index: {}]
  %s3 = inlined_call_operand.hbm [shape: f32[2,2,16,16], index: 3, kind: output, shape index: {}]
  %s4 = sld [smem:[#allocation0]]
  $region49: #{tpu_custom_call.1} parent=0
    _
  %s6 = ssub.s32 1, %s4
  %s7 = scalar_select 0, %s6, %s4
  $region1: #{tpu_custom_call.1} parent=0
    #allocation2 [shape = 'u8[512]{0}', space=smem, size = 0x200, scoped, tag = 'input window, operand 0, single buffered']
    #allocation3 [shape = 's32[2]{0}', space=sflag, size = 0x8, scoped, tag = 'scoped memory for tpu_custom_call.1']
    #allocation4 [shape = 's32[2]{0}', space=sflag, size = 0x8, scoped, tag = 'scoped memory for tpu_custom_call.1']
    #allocation5 [shape = 'u8[32768]{0}', space=vmem, size = 0x8000, scoped, tag = 'output window, operand 0']
    %8 = vsyncpa [#allocation4], 0
    %9 = vsyncpa [#allocation3], 0
    %s10 = scalar_lea.sflag [#allocation3], 1
    %11 = vsyncpa %s10, 0
    loop: start=0, step=1, limit=4
    $region2: #{tpu_custom_call.1} parent=1 // loop_pre_header
      _
    $region3: #{tpu_custom_call.1} parent=1 // loop_header
      %s13 = sphi 0, %s17
      %p14 = scmp.ge.s32.totalorder %s13, 4
      %s21 = sphi 0, %s21
      %s23 = sphi 0, %s21
      %s24 = sphi 0, %s23
      %s38 = sphi 0, %s24
      %s44 = sphi 0, %s46
      %s47 = sphi 0, %s44
      %s48 = sphi 0, %s47
      %s64 = sphi 0, %s48
      %s68 = sphi 0, %s68
      %s70 = sphi 0, %s68
      %s71 = sphi 0, %s70
      %s85 = sphi 0, %s71
      %s91 = sphi 0, %s93
      %s94 = sphi 0, %s91
      %s95 = sphi 0, %s94
      %s111 = sphi 0, %s95
    $region4: #{tpu_custom_call.1} parent=1 // loop_header_branch
      %16 = sbr.rel (%p14) target = $region8
    $region5: #{tpu_custom_call.1} parent=1 // loop_body
      %s18 = ssub.s32 %s13, 1
      %s19 = ssub.s32 %s13, 2
      %s20 = sadd.s32 %s13, 1
      %s22 = sadd.s32 %s21, 1
      %p25 = scmp.eq.s32.totalorder %s13, 1
      %p26 = scmp.ne.s32.totalorder %s21, %s23
      %p27 = scmp.eq.s32.totalorder %s13, 0
      %p28 = por %p26, %p27
      %p29 = scmp.ne.s32.totalorder %s21, %s23
      %p30 = scmp.eq.s32.totalorder %s18, 1
      %p31 = por %p29, %p30
      %p32 = scmp.ne.s32.totalorder %s23, %s24
      %p33 = scmp.eq.s32.totalorder %s18, 0
      %p34 = por %p32, %p33
      %p35 = scmp.ne.s32.totalorder %s23, %s24
      %p36 = scmp.eq.s32.totalorder %s19, 1
      %p37 = por %p35, %p36
      %p39 = scmp.ne.s32.totalorder %s24, %s38
      %p40 = scmp.eq.s32.totalorder %s19, 0
      %p41 = por %p39, %p40
      %s42 = ssub.s32 %s13, %s20
      %p43 = scmp.eq.s32.totalorder %s42, 0
      %s45 = sadd.s32 %s44, 1
      %s46 = scalar_select %p43, %s44, %s45
      %p49 = pneg %p43
      %p50 = scmp.eq.s32.totalorder %s13, 1
      %p51 = por %p49, %p50
      %p52 = scmp.ne.s32.totalorder %s44, %s47
      %p53 = scmp.eq.s32.totalorder %s13, 0
      %p54 = por %p52, %p53
      %p55 = scmp.ne.s32.totalorder %s44, %s47
      %p56 = scmp.eq.s32.totalorder %s18, 1
      %p57 = por %p55, %p56
      %p58 = scmp.ne.s32.totalorder %s47, %s48
      %p59 = scmp.eq.s32.totalorder %s18, 0
      %p60 = por %p58, %p59
      %p61 = scmp.ne.s32.totalorder %s47, %s48
      %p62 = scmp.eq.s32.totalorder %s19, 1
      %p63 = por %p61, %p62
      %p65 = scmp.ne.s32.totalorder %s48, %s64
      %p66 = scmp.eq.s32.totalorder %s19, 0
      %p67 = por %p65, %p66
      %s69 = sadd.s32 %s68, 1
      %p72 = scmp.eq.s32.totalorder %s13, 1
      %p73 = scmp.ne.s32.totalorder %s68, %s70
      %p74 = scmp.eq.s32.totalorder %s13, 0
      %p75 = por %p73, %p74
      %p76 = scmp.ne.s32.totalorder %s68, %s70
      %p77 = scmp.eq.s32.totalorder %s18, 1
      %p78 = por %p76, %p77
      %p79 = scmp.ne.s32.totalorder %s70, %s71
      %p80 = scmp.eq.s32.totalorder %s18, 0
      %p81 = por %p79, %p80
      %p82 = scmp.ne.s32.totalorder %s70, %s71
      %p83 = scmp.eq.s32.totalorder %s19, 1
      %p84 = por %p82, %p83
      %p86 = scmp.ne.s32.totalorder %s71, %s85
      %p87 = scmp.eq.s32.totalorder %s19, 0
      %p88 = por %p86, %p87
      %s89 = ssub.s32 %s13, %s20
      %p90 = scmp.eq.s32.totalorder %s89, 0
      %s92 = sadd.s32 %s91, 1
      %s93 = scalar_select %p90, %s91, %s92
      %p96 = pneg %p90
      %p97 = scmp.eq.s32.totalorder %s13, 1
      %p98 = por %p96, %p97
      %p99 = scmp.ne.s32.totalorder %s91, %s94
      %p100 = scmp.eq.s32.totalorder %s13, 0
      %p101 = por %p99, %p100
      %p102 = scmp.ne.s32.totalorder %s91, %s94
      %p103 = scmp.eq.s32.totalorder %s18, 1
      %p104 = por %p102, %p103
      %p105 = scmp.ne.s32.totalorder %s94, %s95
      %p106 = scmp.eq.s32.totalorder %s18, 0
      %p107 = por %p105, %p106
      %p108 = scmp.ne.s32.totalorder %s94, %s95
      %p109 = scmp.eq.s32.totalorder %s19, 1
      %p110 = por %p108, %p109
      %p112 = scmp.ne.s32.totalorder %s95, %s111
      %p113 = scmp.eq.s32.totalorder %s19, 0
      %p114 = por %p112, %p113
      %p115 = scmp.le.s32.totalorder 1, %s13
      %p116 = scmp.lt.s32.totalorder %s13, 3
      %p117 = pnand %p115, %p116
      %p118 = pneg %p117
      // Predicated region
      $region9: #{tpu_custom_call.1} parent=5 // pred_check
        _
      $region10: #{tpu_custom_call.1} parent=5 // pred_check_branch
        %120 = sbr.rel (%p117) target = $region12
      $region11: #{tpu_custom_call.1} parent=5 // pred_region
        %s121 = ssub.s32 %s13, 1
        // Predicated region
        $region13: #{tpu_custom_call.1} parent=11 // pred_check
          %p122 = pneg %p34
        $region14: #{tpu_custom_call.1} parent=11 // pred_check_branch
          %124 = sbr.rel (%p122) target = $region16
        $region15: #{tpu_custom_call.1} parent=11 // pred_region
          %s126 = ssub.s32 16, 16
          %127 = vsyncadd [#allocation4], %s126
          %s129 = sshll.u32 %s0, 4
          %s130 = int_to_ptr.vmem [resolvable:$true] %s129
          %132 = dma.vmem_to_smem %s130, 16, [#allocation2], [#allocation4]
        $region16: #{tpu_custom_call.1} parent=11 // pred_fallthru
          _
        // Predicated region
        $region17: #{tpu_custom_call.1} parent=11 // pred_check
          %p133 = pneg %p81
        $region18: #{tpu_custom_call.1} parent=11 // pred_check_branch
          %135 = sbr.rel (%p133) target = $region20
        $region19: #{tpu_custom_call.1} parent=11 // pred_region
          _
        $region20: #{tpu_custom_call.1} parent=11 // pred_fallthru
          _
      $region12: #{tpu_custom_call.1} parent=5 // pred_fallthru
        _
      %p136 = scmp.lt.s32.totalorder %s13, 2
      // Predicated region
      $region21: #{tpu_custom_call.1} parent=5 // pred_check
        %p137 = pneg %p136
      $region22: #{tpu_custom_call.1} parent=5 // pred_check_branch
        %139 = sbr.rel (%p137) target = $region24
      $region23: #{tpu_custom_call.1} parent=5 // pred_region
        // Predicated region
        $region25: #{tpu_custom_call.1} parent=23 // pred_check
          %p140 = pneg %p54
        $region26: #{tpu_custom_call.1} parent=23 // pred_check_branch
          %142 = sbr.rel (%p140) target = $region28
        $region27: #{tpu_custom_call.1} parent=23 // pred_region
          %p143 = scmp.lt.s32.totalorder %s13, 1
          %s144 = scalar_select %p143, %s13, 1
          %s145 = smul.addr %s144, 12
          %s146 = smul.addr %s145, 8
          %s147 = scalar_lea.vmem %s1, %s146
        $region28: #{tpu_custom_call.1} parent=23 // pred_fallthru
          _
      $region24: #{tpu_custom_call.1} parent=5 // pred_fallthru
        _
      %p148 = scmp.le.s32.totalorder 1, %s13
      %p149 = scmp.lt.s32.totalorder %s13, 3
      %p150 = pnand %p148, %p149
      %p151 = pneg %p150
      // Predicated region
      $region29: #{tpu_custom_call.1} parent=5 // pred_check
        _
      $region30: #{tpu_custom_call.1} parent=5 // pred_check_branch
        %153 = sbr.rel (%p150) target = $region32
      $region31: #{tpu_custom_call.1} parent=5 // pred_region
        %s154 = ssub.s32 %s13, 1
        // Predicated region
        $region33: #{tpu_custom_call.1} parent=31 // pred_check
          %p155 = pneg %p34
        $region34: #{tpu_custom_call.1} parent=31 // pred_check_branch
          %157 = sbr.rel (%p155) target = $region36
        $region35: #{tpu_custom_call.1} parent=31 // pred_region
          %158 = dma.done [#allocation4], 16
        $region36: #{tpu_custom_call.1} parent=31 // pred_fallthru
          _
        %159 = sfence
        %p160 = pneg %p34
        %p161 = pneg %p31
        %p162 = scmp.lt.s32.totalorder %s18, 1
        %s163 = scalar_select %p162, %s18, 1
        %s164 = smul.addr %s163, 12
        %s165 = smul.addr %s164, 8
        %s166 = scalar_lea.vmem %s1, %s165
        %p167 = pneg %p60
        %p168 = pneg %p57
        %p169 = pneg %p81
        %p170 = pneg %p78
        %p171 = pneg %p107
        %p172 = pneg %p104
        %s173 = sand.u32 %s94, 1
        %s174 = scalar_lea.sflag [#allocation3], %s173
        %s175 = sand.u32 %s94, 1
        %s176 = smul.addr %s175, 32
        %s177 = scalar_lea.vmem [#allocation5], %s176
        %p178 = scmp.lt.s32.totalorder %s18, 1
        %s179 = scalar_select %p178, %s18, 1
        %s180 = smul.addr %s179, 12
        %s181 = smul.addr %s180, 8
        %s182 = scalar_lea.vmem %s1, %s181
        %v183 = vld [vmem:[%s182] sm:$0xff]
        %v184 = vld [vmem:[%s182 + $0x8] sm:$0xff]
        %v185 = vld [vmem:[%s182 + $0x10] sm:$0x3]
        %v186 = vld [vmem:[%s2] sm:$0xff]
        %v187 = vld [vmem:[%s2 + $0x8] sm:$0xff]
        %v188 = vld [vmem:[%s2 + $0x10] sm:$0x3]
        %s189 = scalar_lea.vmem %s2, 24
        %v190 = vld [vmem:[%s189] sm:$0xff]
        %v191 = vld [vmem:[%s189 + $0x8] sm:$0xff]
        %v192 = vld [vmem:[%s189 + $0x10] sm:$0x3]
        %s193 = scalar_lea.vmem %s2, 48
        %v194 = vld [vmem:[%s193] sm:$0xff]
        %v195 = vld [vmem:[%s193 + $0x8] sm:$0xff]
        %v196 = vld [vmem:[%s193 + $0x10] sm:$0x3]
        %vm200 = vcmask 1045504
        %v201 = vrot.slane %v183, 2
        %v202 = vrot.slane %v184, 2
        %v203 = vsel %vm200, %v201, %v202
        %v204 = vrot.slane %v185, 2
        %v205 = vsel %vm200, %v202, %v204
        %vm206 = vcmask 146432
        %v207 = vsel %vm206, %v203, 0
        %v209 = vsel %vm206, %v205, 0
        %vm211 = vcmask 1041408
        %v213 = vsel %vm211, %v196, 0
        %215 = vmatprep.subr.mxu0 0.0
        %216 = vmatpush1.msra.mxu0 %v194
        %217 = vmatprep.subr.mxu0 0.0
        %218 = vmatpush1.msra.mxu0 %v195
        %219 = vmatprep.subr.mxu0 0.0
        %220 = vmatpush1.msra.mxu0 %v213
        %221 = vmatprep.subr.mxu0 0.0
        %222 = vmatpush1.msra.mxu0 0.0
        %223 = vmatprep.subr.mxu0 0.0
        %224 = vmatpush1.msra.mxu0 0.0
        %225 = vmatprep.subr.mxu0 0.0
        %226 = vmatpush1.msra.mxu0 0.0
        %227 = vmatprep.subr.mxu0 0.0
        %228 = vmatpush1.msra.mxu0 0.0
        %229 = vmatprep.subr.mxu0 0.0
        %230 = vmatpush1.msra.mxu0 0.0
        %231 = vmatprep.subr.mxu0 0.0
        %232 = vmatpush1.msra.mxu0 0.0
        %233 = vmatprep.subr.mxu0 0.0
        %234 = vmatpush1.msra.mxu0 0.0
        %235 = vmatprep.subr.mxu0 0.0
        %236 = vmatpush1.msra.mxu0 0.0
        %237 = vmatprep.subr.mxu0 0.0
        %238 = vmatpush1.msra.mxu0 0.0
        %239 = vmatprep.subr.mxu0 0.0
        %240 = vmatpush1.msra.mxu0 0.0
        %241 = vmatprep.subr.mxu0 0.0
        %242 = vmatpush1.msra.mxu0 0.0
        %243 = vmatprep.subr.mxu0 0.0
        %244 = vmatpush1.msra.mxu0 0.0
        %245 = vmatprep.subr.mxu0 0.0
        %246 = vmatpush1.msra.mxu0 0.0
        %247 = vmatprep.subr.mxu0 0.0
        %248 = vmatpush1.msra.mxu0 0.0
        %249 = vmatprep.subr.mxu0 0.0
        %250 = vmatpush1.msra.mxu0 0.0
        %251 = vmatprep.subr.mxu0 0.0
        %252 = vmatpush1.msra.mxu0 0.0
        %253 = vmatprep.subr.mxu0 0.0
        %254 = vmatpush1.msra.mxu0 0.0
        %255 = vmatprep.subr.mxu0 0.0
        %256 = vmatpush1.msra.mxu0 0.0
        %257 = vmatprep.subr.mxu0 0.0
        %258 = vmatpush1.msra.mxu0 0.0
        %259 = vmatprep.subr.mxu0 0.0
        %260 = vmatpush1.msra.mxu0 0.0
        %261 = vmatprep.subr.mxu0 0.0
        %262 = vmatpush1.msra.mxu0 0.0
        %263 = vmatprep.subr.mxu0 0.0
        %264 = vmatpush1.msra.mxu0 0.0
        %265 = vmatprep.subr.mxu0 0.0
        %266 = vmatpush1.msra.mxu0 0.0
        %267 = vmatprep.subr.mxu0 0.0
        %268 = vmatpush1.msra.mxu0 0.0
        %269 = vmatprep.subr.mxu0 0.0
        %270 = vmatpush1.msra.mxu0 0.0
        %271 = vmatprep.subr.mxu0 0.0
        %272 = vmatpush1.msra.mxu0 0.0
        %273 = vmatprep.subr.mxu0 0.0
        %274 = vmatpush1.msra.mxu0 0.0
        %275 = vmatprep.subr.mxu0 0.0
        %276 = vmatpush1.msra.mxu0 0.0
        %277 = vmatprep.subr.mxu0 0.0
        %278 = vmatpush1.msra.mxu0 0.0
        %279 = vmatprep.mubr.f32.mxu0 0.0
        %280 = vmatmul.mubr.f32.gmra.mrb[0].mxu0 %v207
        %v281 = vpop.f32.mrb[0].mxu0
        %v282 = vadd.f32 0.0, %v281
        %v283 = vpop.f32.mrb[0].mxu0
        %284 = vmatprep.mubr.f32.mxu0 0.0
        %285 = vmatmul.mubr.f32.gmra.mrb[0].mxu0 %v209
        %v286 = vpop.f32.mrb[0].mxu0
        %v287 = vadd.f32 0.0, %v286
        %v288 = vpop.f32.mrb[0].mxu0
        %289 = vdwg.mxu0
        %v290 = vsel %vm206, %v183, 0
        %v292 = vsel %vm206, %v184, 0
        %v295 = vsel %vm211, %v188, 0
        %297 = vmatprep.subr.mxu0 0.0
        %298 = vmatpush1.msra.mxu0 %v186
        %299 = vmatprep.subr.mxu0 0.0
        %300 = vmatpush1.msra.mxu0 %v187
        %301 = vmatprep.subr.mxu0 0.0
        %302 = vmatpush1.msra.mxu0 %v295
        %303 = vmatprep.subr.mxu0 0.0
        %304 = vmatpush1.msra.mxu0 0.0
        %305 = vmatprep.subr.mxu0 0.0
        %306 = vmatpush1.msra.mxu0 0.0
        %307 = vmatprep.subr.mxu0 0.0
        %308 = vmatpush1.msra.mxu0 0.0
        %309 = vmatprep.subr.mxu0 0.0
        %310 = vmatpush1.msra.mxu0 0.0
        %311 = vmatprep.subr.mxu0 0.0
        %312 = vmatpush1.msra.mxu0 0.0
        %313 = vmatprep.subr.mxu0 0.0
        %314 = vmatpush1.msra.mxu0 0.0
        %315 = vmatprep.subr.mxu0 0.0
        %316 = vmatpush1.msra.mxu0 0.0
        %317 = vmatprep.subr.mxu0 0.0
        %318 = vmatpush1.msra.mxu0 0.0
        %319 = vmatprep.subr.mxu0 0.0
        %320 = vmatpush1.msra.mxu0 0.0
        %321 = vmatprep.subr.mxu0 0.0
        %322 = vmatpush1.msra.mxu0 0.0
        %323 = vmatprep.subr.mxu0 0.0
        %324 = vmatpush1.msra.mxu0 0.0
        %325 = vmatprep.subr.mxu0 0.0
        %326 = vmatpush1.msra.mxu0 0.0
        %327 = vmatprep.subr.mxu0 0.0
        %328 = vmatpush1.msra.mxu0 0.0
        %329 = vmatprep.subr.mxu0 0.0
        %330 = vmatpush1.msra.mxu0 0.0
        %331 = vmatprep.subr.mxu0 0.0
        %332 = vmatpush1.msra.mxu0 0.0
        %333 = vmatprep.subr.mxu0 0.0
        %334 = vmatpush1.msra.mxu0 0.0
        %335 = vmatprep.subr.mxu0 0.0
        %336 = vmatpush1.msra.mxu0 0.0
        %337 = vmatprep.subr.mxu0 0.0
        %338 = vmatpush1.msra.mxu0 0.0
        %339 = vmatprep.subr.mxu0 0.0
        %340 = vmatpush1.msra.mxu0 0.0
        %341 = vmatprep.subr.mxu0 0.0
        %342 = vmatpush1.msra.mxu0 0.0
        %343 = vmatprep.subr.mxu0 0.0
        %344 = vmatpush1.msra.mxu0 0.0
        %345 = vmatprep.subr.mxu0 0.0
        %346 = vmatpush1.msra.mxu0 0.0
        %347 = vmatprep.subr.mxu0 0.0
        %348 = vmatpush1.msra.mxu0 0.0
        %349 = vmatprep.subr.mxu0 0.0
        %350 = vmatpush1.msra.mxu0 0.0
        %351 = vmatprep.subr.mxu0 0.0
        %352 = vmatpush1.msra.mxu0 0.0
        %353 = vmatprep.subr.mxu0 0.0
        %354 = vmatpush1.msra.mxu0 0.0
        %355 = vmatprep.subr.mxu0 0.0
        %356 = vmatpush1.msra.mxu0 0.0
        %357 = vmatprep.subr.mxu0 0.0
        %358 = vmatpush1.msra.mxu0 0.0
        %359 = vmatprep.subr.mxu0 0.0
        %360 = vmatpush1.msra.mxu0 0.0
        %361 = vmatprep.mubr.f32.mxu0 0.0
        %362 = vmatmul.mubr.f32.gmra.mrb[0].mxu0 %v290
        %v363 = vpop.f32.mrb[0].mxu0
        %v364 = vadd.f32 %v282, %v363
        %v365 = vpop.f32.mrb[0].mxu0
        %366 = vmatprep.mubr.f32.mxu0 0.0
        %367 = vmatmul.mubr.f32.gmra.mrb[0].mxu0 %v292
        %v368 = vpop.f32.mrb[0].mxu0
        %v369 = vadd.f32 %v287, %v368
        %v370 = vpop.f32.mrb[0].mxu0
        %371 = vdwg.mxu0
        %s372 = scalar_lea.vmem %s182, 24
        %v373 = vld [vmem:[%s372] sm:$0xff]
        %v374 = vld [vmem:[%s372 + $0x8] sm:$0xff]
        %v375 = vld [vmem:[%s372 + $0x10] sm:$0x3]
        %s376 = scalar_lea.vmem %s2, 72
        %v377 = vld [vmem:[%s376] sm:$0xff]
        %v378 = vld [vmem:[%s376 + $0x8] sm:$0xff]
        %v379 = vld [vmem:[%s376 + $0x10] sm:$0x3]
        %v381 = vsel %vm206, %v373, 0
        %v384 = vsel %vm206, %v374, 0
        %v387 = vsel %vm211, %v379, 0
        %389 = vmatprep.subr.mxu0 0.0
        %390 = vmatpush1.msra.mxu0 %v377
        %391 = vmatprep.subr.mxu0 0.0
        %392 = vmatpush1.msra.mxu0 %v378
        %393 = vmatprep.subr.mxu0 0.0
        %394 = vmatpush1.msra.mxu0 %v387
        %395 = vmatprep.subr.mxu0 0.0
        %396 = vmatpush1.msra.mxu0 0.0
        %397 = vmatprep.subr.mxu0 0.0
        %398 = vmatpush1.msra.mxu0 0.0
        %399 = vmatprep.subr.mxu0 0.0
        %400 = vmatpush1.msra.mxu0 0.0
        %401 = vmatprep.subr.mxu0 0.0
        %402 = vmatpush1.msra.mxu0 0.0
        %403 = vmatprep.subr.mxu0 0.0
        %404 = vmatpush1.msra.mxu0 0.0
        %405 = vmatprep.subr.mxu0 0.0
        %406 = vmatpush1.msra.mxu0 0.0
        %407 = vmatprep.subr.mxu0 0.0
        %408 = vmatpush1.msra.mxu0 0.0
        %409 = vmatprep.subr.mxu0 0.0
        %410 = vmatpush1.msra.mxu0 0.0
        %411 = vmatprep.subr.mxu0 0.0
        %412 = vmatpush1.msra.mxu0 0.0
        %413 = vmatprep.subr.mxu0 0.0
        %414 = vmatpush1.msra.mxu0 0.0
        %415 = vmatprep.subr.mxu0 0.0
        %416 = vmatpush1.msra.mxu0 0.0
        %417 = vmatprep.subr.mxu0 0.0
        %418 = vmatpush1.msra.mxu0 0.0
        %419 = vmatprep.subr.mxu0 0.0
        %420 = vmatpush1.msra.mxu0 0.0
        %421 = vmatprep.subr.mxu0 0.0
        %422 = vmatpush1.msra.mxu0 0.0
        %423 = vmatprep.subr.mxu0 0.0
        %424 = vmatpush1.msra.mxu0 0.0
        %425 = vmatprep.subr.mxu0 0.0
        %426 = vmatpush1.msra.mxu0 0.0
        %427 = vmatprep.subr.mxu0 0.0
        %428 = vmatpush1.msra.mxu0 0.0
        %429 = vmatprep.subr.mxu0 0.0
        %430 = vmatpush1.msra.mxu0 0.0
        %431 = vmatprep.subr.mxu0 0.0
        %432 = vmatpush1.msra.mxu0 0.0
        %433 = vmatprep.subr.mxu0 0.0
        %434 = vmatpush1.msra.mxu0 0.0
        %435 = vmatprep.subr.mxu0 0.0
        %436 = vmatpush1.msra.mxu0 0.0
        %437 = vmatprep.subr.mxu0 0.0
        %438 = vmatpush1.msra.mxu0 0.0
        %439 = vmatprep.subr.mxu0 0.0
        %440 = vmatpush1.msra.mxu0 0.0
        %441 = vmatprep.subr.mxu0 0.0
        %442 = vmatpush1.msra.mxu0 0.0
        %443 = vmatprep.subr.mxu0 0.0
        %444 = vmatpush1.msra.mxu0 0.0
        %445 = vmatprep.subr.mxu0 0.0
        %446 = vmatpush1.msra.mxu0 0.0
        %447 = vmatprep.subr.mxu0 0.0
        %448 = vmatpush1.msra.mxu0 0.0
        %449 = vmatprep.subr.mxu0 0.0
        %450 = vmatpush1.msra.mxu0 0.0
        %451 = vmatprep.subr.mxu0 0.0
        %452 = vmatpush1.msra.mxu0 0.0
        %453 = vmatprep.mubr.f32.mxu0 0.0
        %454 = vmatmul.mubr.f32.gmra.mrb[0].mxu0 %v381
        %v455 = vpop.f32.mrb[0].mxu0
        %v456 = vadd.f32 0.0, %v455
        %v457 = vpop.f32.mrb[0].mxu0
        %458 = vmatprep.mubr.f32.mxu0 0.0
        %459 = vmatmul.mubr.f32.gmra.mrb[0].mxu0 %v384
        %v460 = vpop.f32.mrb[0].mxu0
        %v461 = vadd.f32 0.0, %v460
        %v462 = vpop.f32.mrb[0].mxu0
        %463 = vdwg.mxu0
        %vm464 = vcmask 1046528
        %v465 = vrot.slane %v183, 1
        %v466 = vrot.slane %v184, 1
        %v467 = vsel %vm464, %v465, %v466
        %v468 = vrot.slane %v185, 1
        %v469 = vsel %vm464, %v466, %v468
        %v470 = vsel %vm206, %v467, 0
        %v472 = vsel %vm206, %v469, 0
        %v475 = vsel %vm211, %v192, 0
        %477 = vmatprep.subr.mxu0 0.0
        %478 = vmatpush1.msra.mxu0 %v190
        %479 = vmatprep.subr.mxu0 0.0
        %480 = vmatpush1.msra.mxu0 %v191
        %481 = vmatprep.subr.mxu0 0.0
        %482 = vmatpush1.msra.mxu0 %v475
        %483 = vmatprep.subr.mxu0 0.0
        %484 = vmatpush1.msra.mxu0 0.0
        %485 = vmatprep.subr.mxu0 0.0
        %486 = vmatpush1.msra.mxu0 0.0
        %487 = vmatprep.subr.mxu0 0.0
        %488 = vmatpush1.msra.mxu0 0.0
        %489 = vmatprep.subr.mxu0 0.0
        %490 = vmatpush1.msra.mxu0 0.0
        %491 = vmatprep.subr.mxu0 0.0
        %492 = vmatpush1.msra.mxu0 0.0
        %493 = vmatprep.subr.mxu0 0.0
        %494 = vmatpush1.msra.mxu0 0.0
        %495 = vmatprep.subr.mxu0 0.0
        %496 = vmatpush1.msra.mxu0 0.0
        %497 = vmatprep.subr.mxu0 0.0
        %498 = vmatpush1.msra.mxu0 0.0
        %499 = vmatprep.subr.mxu0 0.0
        %500 = vmatpush1.msra.mxu0 0.0
        %501 = vmatprep.subr.mxu0 0.0
        %502 = vmatpush1.msra.mxu0 0.0
        %503 = vmatprep.subr.mxu0 0.0
        %504 = vmatpush1.msra.mxu0 0.0
        %505 = vmatprep.subr.mxu0 0.0
        %506 = vmatpush1.msra.mxu0 0.0
        %507 = vmatprep.subr.mxu0 0.0
        %508 = vmatpush1.msra.mxu0 0.0
        %509 = vmatprep.subr.mxu0 0.0
        %510 = vmatpush1.msra.mxu0 0.0
        %511 = vmatprep.subr.mxu0 0.0
        %512 = vmatpush1.msra.mxu0 0.0
        %513 = vmatprep.subr.mxu0 0.0
        %514 = vmatpush1.msra.mxu0 0.0
        %515 = vmatprep.subr.mxu0 0.0
        %516 = vmatpush1.msra.mxu0 0.0
        %517 = vmatprep.subr.mxu0 0.0
        %518 = vmatpush1.msra.mxu0 0.0
        %519 = vmatprep.subr.mxu0 0.0
        %520 = vmatpush1.msra.mxu0 0.0
        %521 = vmatprep.subr.mxu0 0.0
        %522 = vmatpush1.msra.mxu0 0.0
        %523 = vmatprep.subr.mxu0 0.0
        %524 = vmatpush1.msra.mxu0 0.0
        %525 = vmatprep.subr.mxu0 0.0
        %526 = vmatpush1.msra.mxu0 0.0
        %527 = vmatprep.subr.mxu0 0.0
        %528 = vmatpush1.msra.mxu0 0.0
        %529 = vmatprep.subr.mxu0 0.0
        %530 = vmatpush1.msra.mxu0 0.0
        %531 = vmatprep.subr.mxu0 0.0
        %532 = vmatpush1.msra.mxu0 0.0
        %533 = vmatprep.subr.mxu0 0.0
        %534 = vmatpush1.msra.mxu0 0.0
        %535 = vmatprep.subr.mxu0 0.0
        %536 = vmatpush1.msra.mxu0 0.0
        %537 = vmatprep.subr.mxu0 0.0
        %538 = vmatpush1.msra.mxu0 0.0
        %539 = vmatprep.subr.mxu0 0.0
        %540 = vmatpush1.msra.mxu0 0.0
        %541 = vmatprep.mubr.f32.mxu0 0.0
        %542 = vmatmul.mubr.f32.gmra.mrb[0].mxu0 %v470
        %v543 = vpop.f32.mrb[0].mxu0
        %v544 = vadd.f32 %v456, %v543
        %v545 = vpop.f32.mrb[0].mxu0
        %546 = vmatprep.mubr.f32.mxu0 0.0
        %547 = vmatmul.mubr.f32.gmra.mrb[0].mxu0 %v472
        %v548 = vpop.f32.mrb[0].mxu0
        %v549 = vadd.f32 %v461, %v548
        %v550 = vpop.f32.mrb[0].mxu0
        %551 = vdwg.mxu0
        %s552 = scalar_lea.vmem %s2, 96
        %v553 = vld [vmem:[%s552] sm:$0xff]
        %v554 = vld [vmem:[%s552 + $0x8] sm:$0xff]
        %v555 = vld [vmem:[%s552 + $0x10] sm:$0x3]
        %v557 = vrot.slane %v373, 1
        %v558 = vrot.slane %v374, 1
        %v559 = vsel %vm464, %v557, %v558
        %v560 = vrot.slane %v375, 1
        %v561 = vsel %vm464, %v558, %v560
        %v562 = vsel %vm206, %v559, 0
        %v564 = vsel %vm206, %v561, 0
        %v567 = vsel %vm211, %v555, 0
        %569 = vmatprep.subr.mxu0 0.0
        %570 = vmatpush1.msra.mxu0 %v553
        %571 = vmatprep.subr.mxu0 0.0
        %572 = vmatpush1.msra.mxu0 %v554
        %573 = vmatprep.subr.mxu0 0.0
        %574 = vmatpush1.msra.mxu0 %v567
        %575 = vmatprep.subr.mxu0 0.0
        %576 = vmatpush1.msra.mxu0 0.0
        %577 = vmatprep.subr.mxu0 0.0
        %578 = vmatpush1.msra.mxu0 0.0
        %579 = vmatprep.subr.mxu0 0.0
        %580 = vmatpush1.msra.mxu0 0.0
        %581 = vmatprep.subr.mxu0 0.0
        %582 = vmatpush1.msra.mxu0 0.0
        %583 = vmatprep.subr.mxu0 0.0
        %584 = vmatpush1.msra.mxu0 0.0
        %585 = vmatprep.subr.mxu0 0.0
        %586 = vmatpush1.msra.mxu0 0.0
        %587 = vmatprep.subr.mxu0 0.0
        %588 = vmatpush1.msra.mxu0 0.0
        %589 = vmatprep.subr.mxu0 0.0
        %590 = vmatpush1.msra.mxu0 0.0
        %591 = vmatprep.subr.mxu0 0.0
        %592 = vmatpush1.msra.mxu0 0.0
        %593 = vmatprep.subr.mxu0 0.0
        %594 = vmatpush1.msra.mxu0 0.0
        %595 = vmatprep.subr.mxu0 0.0
        %596 = vmatpush1.msra.mxu0 0.0
        %597 = vmatprep.subr.mxu0 0.0
        %598 = vmatpush1.msra.mxu0 0.0
        %599 = vmatprep.subr.mxu0 0.0
        %600 = vmatpush1.msra.mxu0 0.0
        %601 = vmatprep.subr.mxu0 0.0
        %602 = vmatpush1.msra.mxu0 0.0
        %603 = vmatprep.subr.mxu0 0.0
        %604 = vmatpush1.msra.mxu0 0.0
        %605 = vmatprep.subr.mxu0 0.0
        %606 = vmatpush1.msra.mxu0 0.0
        %607 = vmatprep.subr.mxu0 0.0
        %608 = vmatpush1.msra.mxu0 0.0
        %609 = vmatprep.subr.mxu0 0.0
        %610 = vmatpush1.msra.mxu0 0.0
        %611 = vmatprep.subr.mxu0 0.0
        %612 = vmatpush1.msra.mxu0 0.0
        %613 = vmatprep.subr.mxu0 0.0
        %614 = vmatpush1.msra.mxu0 0.0
        %615 = vmatprep.subr.mxu0 0.0
        %616 = vmatpush1.msra.mxu0 0.0
        %617 = vmatprep.subr.mxu0 0.0
        %618 = vmatpush1.msra.mxu0 0.0
        %619 = vmatprep.subr.mxu0 0.0
        %620 = vmatpush1.msra.mxu0 0.0
        %621 = vmatprep.subr.mxu0 0.0
        %622 = vmatpush1.msra.mxu0 0.0
        %623 = vmatprep.subr.mxu0 0.0
        %624 = vmatpush1.msra.mxu0 0.0
        %625 = vmatprep.subr.mxu0 0.0
        %626 = vmatpush1.msra.mxu0 0.0
        %627 = vmatprep.subr.mxu0 0.0
        %628 = vmatpush1.msra.mxu0 0.0
        %629 = vmatprep.subr.mxu0 0.0
        %630 = vmatpush1.msra.mxu0 0.0
        %631 = vmatprep.subr.mxu0 0.0
        %632 = vmatpush1.msra.mxu0 0.0
        %633 = vmatprep.mubr.f32.mxu0 0.0
        %634 = vmatmul.mubr.f32.gmra.mrb[0].mxu0 %v562
        %v635 = vpop.f32.mrb[0].mxu0
        %v636 = vadd.f32 0.0, %v635
        %v637 = vpop.f32.mrb[0].mxu0
        %638 = vmatprep.mubr.f32.mxu0 0.0
        %639 = vmatmul.mubr.f32.gmra.mrb[0].mxu0 %v564
        %v640 = vpop.f32.mrb[0].mxu0
        %v641 = vadd.f32 0.0, %v640
        %v642 = vpop.f32.mrb[0].mxu0
        %643 = vdwg.mxu0
        %v644 = vadd.f32 %v364, %v636
        %v645 = vadd.f32 %v369, %v641
        %s646 = scalar_lea.vmem %s2, 120
        %v647 = vld [vmem:[%s646] sm:$0xff]
        %v648 = vld [vmem:[%s646 + $0x8] sm:$0xff]
        %v649 = vld [vmem:[%s646 + $0x10] sm:$0x3]
        %v650 = vrot.slane %v373, 2
        %v651 = vrot.slane %v374, 2
        %v652 = vsel %vm200, %v650, %v651
        %v653 = vrot.slane %v375, 2
        %v654 = vsel %vm200, %v651, %v653
        %v655 = vsel %vm206, %v652, 0
        %v657 = vsel %vm206, %v654, 0
        %v660 = vsel %vm211, %v649, 0
        %662 = vmatprep.subr.mxu0 0.0
        %663 = vmatpush1.msra.mxu0 %v647
        %664 = vmatprep.subr.mxu0 0.0
        %665 = vmatpush1.msra.mxu0 %v648
        %666 = vmatprep.subr.mxu0 0.0
        %667 = vmatpush1.msra.mxu0 %v660
        %668 = vmatprep.subr.mxu0 0.0
        %669 = vmatpush1.msra.mxu0 0.0
        %670 = vmatprep.subr.mxu0 0.0
        %671 = vmatpush1.msra.mxu0 0.0
        %672 = vmatprep.subr.mxu0 0.0
        %673 = vmatpush1.msra.mxu0 0.0
        %674 = vmatprep.subr.mxu0 0.0
        %675 = vmatpush1.msra.mxu0 0.0
        %676 = vmatprep.subr.mxu0 0.0
        %677 = vmatpush1.msra.mxu0 0.0
        %678 = vmatprep.subr.mxu0 0.0
        %679 = vmatpush1.msra.mxu0 0.0
        %680 = vmatprep.subr.mxu0 0.0
        %681 = vmatpush1.msra.mxu0 0.0
        %682 = vmatprep.subr.mxu0 0.0
        %683 = vmatpush1.msra.mxu0 0.0
        %684 = vmatprep.subr.mxu0 0.0
        %685 = vmatpush1.msra.mxu0 0.0
        %686 = vmatprep.subr.mxu0 0.0
        %687 = vmatpush1.msra.mxu0 0.0
        %688 = vmatprep.subr.mxu0 0.0
        %689 = vmatpush1.msra.mxu0 0.0
        %690 = vmatprep.subr.mxu0 0.0
        %691 = vmatpush1.msra.mxu0 0.0
        %692 = vmatprep.subr.mxu0 0.0
        %693 = vmatpush1.msra.mxu0 0.0
        %694 = vmatprep.subr.mxu0 0.0
        %695 = vmatpush1.msra.mxu0 0.0
        %696 = vmatprep.subr.mxu0 0.0
        %697 = vmatpush1.msra.mxu0 0.0
        %698 = vmatprep.subr.mxu0 0.0
        %699 = vmatpush1.msra.mxu0 0.0
        %700 = vmatprep.subr.mxu0 0.0
        %701 = vmatpush1.msra.mxu0 0.0
        %702 = vmatprep.subr.mxu0 0.0
        %703 = vmatpush1.msra.mxu0 0.0
        %704 = vmatprep.subr.mxu0 0.0
        %705 = vmatpush1.msra.mxu0 0.0
        %706 = vmatprep.subr.mxu0 0.0
        %707 = vmatpush1.msra.mxu0 0.0
        %708 = vmatprep.subr.mxu0 0.0
        %709 = vmatpush1.msra.mxu0 0.0
        %710 = vmatprep.subr.mxu0 0.0
        %711 = vmatpush1.msra.mxu0 0.0
        %712 = vmatprep.subr.mxu0 0.0
        %713 = vmatpush1.msra.mxu0 0.0
        %714 = vmatprep.subr.mxu0 0.0
        %715 = vmatpush1.msra.mxu0 0.0
        %716 = vmatprep.subr.mxu0 0.0
        %717 = vmatpush1.msra.mxu0 0.0
        %718 = vmatprep.subr.mxu0 0.0
        %719 = vmatpush1.msra.mxu0 0.0
        %720 = vmatprep.subr.mxu0 0.0
        %721 = vmatpush1.msra.mxu0 0.0
        %722 = vmatprep.subr.mxu0 0.0
        %723 = vmatpush1.msra.mxu0 0.0
        %724 = vmatprep.subr.mxu0 0.0
        %725 = vmatpush1.msra.mxu0 0.0
        %726 = vmatprep.mubr.f32.mxu0 0.0
        %727 = vmatmul.mubr.f32.gmra.mrb[0].mxu0 %v655
        %v728 = vpop.f32.mrb[0].mxu0
        %v729 = vadd.f32 0.0, %v728
        %v730 = vpop.f32.mrb[0].mxu0
        %731 = vmatprep.mubr.f32.mxu0 0.0
        %732 = vmatmul.mubr.f32.gmra.mrb[0].mxu0 %v657
        %v733 = vpop.f32.mrb[0].mxu0
        %v734 = vadd.f32 0.0, %v733
        %v735 = vpop.f32.mrb[0].mxu0
        %736 = vdwg.mxu0
        %v737 = vadd.f32 %v544, %v729
        %v738 = vadd.f32 %v549, %v734
        %s739 = scalar_lea.vmem %s182, 48
        %v740 = vld [vmem:[%s739] sm:$0xff]
        %v741 = vld [vmem:[%s739 + $0x8] sm:$0xff]
        %v742 = vld [vmem:[%s739 + $0x10] sm:$0x3]
        %s743 = scalar_lea.vmem %s2, 144
        %v744 = vld [vmem:[%s743] sm:$0xff]
        %v745 = vld [vmem:[%s743 + $0x8] sm:$0xff]
        %v746 = vld [vmem:[%s743 + $0x10] sm:$0x3]
        %v748 = vsel %vm206, %v740, 0
        %v751 = vsel %vm206, %v741, 0
        %v754 = vsel %vm211, %v746, 0
        %756 = vmatprep.subr.mxu0 0.0
        %757 = vmatpush1.msra.mxu0 %v744
        %758 = vmatprep.subr.mxu0 0.0
        %759 = vmatpush1.msra.mxu0 %v745
        %760 = vmatprep.subr.mxu0 0.0
        %761 = vmatpush1.msra.mxu0 %v754
        %762 = vmatprep.subr.mxu0 0.0
        %763 = vmatpush1.msra.mxu0 0.0
        %764 = vmatprep.subr.mxu0 0.0
        %765 = vmatpush1.msra.mxu0 0.0
        %766 = vmatprep.subr.mxu0 0.0
        %767 = vmatpush1.msra.mxu0 0.0
        %768 = vmatprep.subr.mxu0 0.0
        %769 = vmatpush1.msra.mxu0 0.0
        %770 = vmatprep.subr.mxu0 0.0
        %771 = vmatpush1.msra.mxu0 0.0
        %772 = vmatprep.subr.mxu0 0.0
        %773 = vmatpush1.msra.mxu0 0.0
        %774 = vmatprep.subr.mxu0 0.0
        %775 = vmatpush1.msra.mxu0 0.0
        %776 = vmatprep.subr.mxu0 0.0
        %777 = vmatpush1.msra.mxu0 0.0
        %778 = vmatprep.subr.mxu0 0.0
        %779 = vmatpush1.msra.mxu0 0.0
        %780 = vmatprep.subr.mxu0 0.0
        %781 = vmatpush1.msra.mxu0 0.0
        %782 = vmatprep.subr.mxu0 0.0
        %783 = vmatpush1.msra.mxu0 0.0
        %784 = vmatprep.subr.mxu0 0.0
        %785 = vmatpush1.msra.mxu0 0.0
        %786 = vmatprep.subr.mxu0 0.0
        %787 = vmatpush1.msra.mxu0 0.0
        %788 = vmatprep.subr.mxu0 0.0
        %789 = vmatpush1.msra.mxu0 0.0
        %790 = vmatprep.subr.mxu0 0.0
        %791 = vmatpush1.msra.mxu0 0.0
        %792 = vmatprep.subr.mxu0 0.0
        %793 = vmatpush1.msra.mxu0 0.0
        %794 = vmatprep.subr.mxu0 0.0
        %795 = vmatpush1.msra.mxu0 0.0
        %796 = vmatprep.subr.mxu0 0.0
        %797 = vmatpush1.msra.mxu0 0.0
        %798 = vmatprep.subr.mxu0 0.0
        %799 = vmatpush1.msra.mxu0 0.0
        %800 = vmatprep.subr.mxu0 0.0
        %801 = vmatpush1.msra.mxu0 0.0
        %802 = vmatprep.subr.mxu0 0.0
        %803 = vmatpush1.msra.mxu0 0.0
        %804 = vmatprep.subr.mxu0 0.0
        %805 = vmatpush1.msra.mxu0 0.0
        %806 = vmatprep.subr.mxu0 0.0
        %807 = vmatpush1.msra.mxu0 0.0
        %808 = vmatprep.subr.mxu0 0.0
        %809 = vmatpush1.msra.mxu0 0.0
        %810 = vmatprep.subr.mxu0 0.0
        %811 = vmatpush1.msra.mxu0 0.0
        %812 = vmatprep.subr.mxu0 0.0
        %813 = vmatpush1.msra.mxu0 0.0
        %814 = vmatprep.subr.mxu0 0.0
        %815 = vmatpush1.msra.mxu0 0.0
        %816 = vmatprep.subr.mxu0 0.0
        %817 = vmatpush1.msra.mxu0 0.0
        %818 = vmatprep.subr.mxu0 0.0
        %819 = vmatpush1.msra.mxu0 0.0
        %820 = vmatprep.mubr.f32.mxu0 0.0
        %821 = vmatmul.mubr.f32.gmra.mrb[0].mxu0 %v748
        %v822 = vpop.f32.mrb[0].mxu0
        %v823 = vadd.f32 0.0, %v822
        %v824 = vpop.f32.mrb[0].mxu0
        %825 = vmatprep.mubr.f32.mxu0 0.0
        %826 = vmatmul.mubr.f32.gmra.mrb[0].mxu0 %v751
        %v827 = vpop.f32.mrb[0].mxu0
        %v828 = vadd.f32 0.0, %v827
        %v829 = vpop.f32.mrb[0].mxu0
        %830 = vdwg.mxu0
        %v831 = vadd.f32 %v644, %v823
        %v832 = vadd.f32 %v645, %v828
        %s833 = scalar_lea.vmem %s2, 168
        %v834 = vld [vmem:[%s833] sm:$0xff]
        %v835 = vld [vmem:[%s833 + $0x8] sm:$0xff]
        %v836 = vld [vmem:[%s833 + $0x10] sm:$0x3]
        %v838 = vrot.slane %v740, 1
        %v839 = vrot.slane %v741, 1
        %v840 = vsel %vm464, %v838, %v839
        %v841 = vrot.slane %v742, 1
        %v842 = vsel %vm464, %v839, %v841
        %v843 = vsel %vm206, %v840, 0
        %v845 = vsel %vm206, %v842, 0
        %v848 = vsel %vm211, %v836, 0
        %850 = vmatprep.subr.mxu0 0.0
        %851 = vmatpush1.msra.mxu0 %v834
        %852 = vmatprep.subr.mxu0 0.0
        %853 = vmatpush1.msra.mxu0 %v835
        %854 = vmatprep.subr.mxu0 0.0
        %855 = vmatpush1.msra.mxu0 %v848
        %856 = vmatprep.subr.mxu0 0.0
        %857 = vmatpush1.msra.mxu0 0.0
        %858 = vmatprep.subr.mxu0 0.0
        %859 = vmatpush1.msra.mxu0 0.0
        %860 = vmatprep.subr.mxu0 0.0
        %861 = vmatpush1.msra.mxu0 0.0
        %862 = vmatprep.subr.mxu0 0.0
        %863 = vmatpush1.msra.mxu0 0.0
        %864 = vmatprep.subr.mxu0 0.0
        %865 = vmatpush1.msra.mxu0 0.0
        %866 = vmatprep.subr.mxu0 0.0
        %867 = vmatpush1.msra.mxu0 0.0
        %868 = vmatprep.subr.mxu0 0.0
        %869 = vmatpush1.msra.mxu0 0.0
        %870 = vmatprep.subr.mxu0 0.0
        %871 = vmatpush1.msra.mxu0 0.0
        %872 = vmatprep.subr.mxu0 0.0
        %873 = vmatpush1.msra.mxu0 0.0
        %874 = vmatprep.subr.mxu0 0.0
        %875 = vmatpush1.msra.mxu0 0.0
        %876 = vmatprep.subr.mxu0 0.0
        %877 = vmatpush1.msra.mxu0 0.0
        %878 = vmatprep.subr.mxu0 0.0
        %879 = vmatpush1.msra.mxu0 0.0
        %880 = vmatprep.subr.mxu0 0.0
        %881 = vmatpush1.msra.mxu0 0.0
        %882 = vmatprep.subr.mxu0 0.0
        %883 = vmatpush1.msra.mxu0 0.0
        %884 = vmatprep.subr.mxu0 0.0
        %885 = vmatpush1.msra.mxu0 0.0
        %886 = vmatprep.subr.mxu0 0.0
        %887 = vmatpush1.msra.mxu0 0.0
        %888 = vmatprep.subr.mxu0 0.0
        %889 = vmatpush1.msra.mxu0 0.0
        %890 = vmatprep.subr.mxu0 0.0
        %891 = vmatpush1.msra.mxu0 0.0
        %892 = vmatprep.subr.mxu0 0.0
        %893 = vmatpush1.msra.mxu0 0.0
        %894 = vmatprep.subr.mxu0 0.0
        %895 = vmatpush1.msra.mxu0 0.0
        %896 = vmatprep.subr.mxu0 0.0
        %897 = vmatpush1.msra.mxu0 0.0
        %898 = vmatprep.subr.mxu0 0.0
        %899 = vmatpush1.msra.mxu0 0.0
        %900 = vmatprep.subr.mxu0 0.0
        %901 = vmatpush1.msra.mxu0 0.0
        %902 = vmatprep.subr.mxu0 0.0
        %903 = vmatpush1.msra.mxu0 0.0
        %904 = vmatprep.subr.mxu0 0.0
        %905 = vmatpush1.msra.mxu0 0.0
        %906 = vmatprep.subr.mxu0 0.0
        %907 = vmatpush1.msra.mxu0 0.0
        %908 = vmatprep.subr.mxu0 0.0
        %909 = vmatpush1.msra.mxu0 0.0
        %910 = vmatprep.subr.mxu0 0.0
        %911 = vmatpush1.msra.mxu0 0.0
        %912 = vmatprep.subr.mxu0 0.0
        %913 = vmatpush1.msra.mxu0 0.0
        %914 = vmatprep.mubr.f32.mxu0 0.0
        %915 = vmatmul.mubr.f32.gmra.mrb[0].mxu0 %v843
        %v916 = vpop.f32.mrb[0].mxu0
        %v917 = vadd.f32 0.0, %v916
        %v918 = vpop.f32.mrb[0].mxu0
        %919 = vmatprep.mubr.f32.mxu0 0.0
        %920 = vmatmul.mubr.f32.gmra.mrb[0].mxu0 %v845
        %v921 = vpop.f32.mrb[0].mxu0
        %v922 = vadd.f32 0.0, %v921
        %v923 = vpop.f32.mrb[0].mxu0
        %924 = vdwg.mxu0
        %v925 = vadd.f32 %v737, %v917
        %v926 = vadd.f32 %v738, %v922
        %s927 = scalar_lea.vmem %s2, 192
        %v928 = vld [vmem:[%s927] sm:$0xff]
        %v929 = vld [vmem:[%s927 + $0x8] sm:$0xff]
        %v930 = vld [vmem:[%s927 + $0x10] sm:$0x3]
        %v931 = vrot.slane %v740, 2
        %v932 = vrot.slane %v741, 2
        %v933 = vsel %vm200, %v931, %v932
        %v934 = vrot.slane %v742, 2
        %v935 = vsel %vm200, %v932, %v934
        %v936 = vsel %vm206, %v933, 0
        %v938 = vsel %vm206, %v935, 0
        %v941 = vsel %vm211, %v930, 0
        %943 = vmatprep.subr.mxu0 0.0
        %944 = vmatpush1.msra.mxu0 %v928
        %945 = vmatprep.subr.mxu0 0.0
        %946 = vmatpush1.msra.mxu0 %v929
        %947 = vmatprep.subr.mxu0 0.0
        %948 = vmatpush1.msra.mxu0 %v941
        %949 = vmatprep.subr.mxu0 0.0
        %950 = vmatpush1.msra.mxu0 0.0
        %951 = vmatprep.subr.mxu0 0.0
        %952 = vmatpush1.msra.mxu0 0.0
        %953 = vmatprep.subr.mxu0 0.0
        %954 = vmatpush1.msra.mxu0 0.0
        %955 = vmatprep.subr.mxu0 0.0
        %956 = vmatpush1.msra.mxu0 0.0
        %957 = vmatprep.subr.mxu0 0.0
        %958 = vmatpush1.msra.mxu0 0.0
        %959 = vmatprep.subr.mxu0 0.0
        %960 = vmatpush1.msra.mxu0 0.0
        %961 = vmatprep.subr.mxu0 0.0
        %962 = vmatpush1.msra.mxu0 0.0
        %963 = vmatprep.subr.mxu0 0.0
        %964 = vmatpush1.msra.mxu0 0.0
        %965 = vmatprep.subr.mxu0 0.0
        %966 = vmatpush1.msra.mxu0 0.0
        %967 = vmatprep.subr.mxu0 0.0
        %968 = vmatpush1.msra.mxu0 0.0
        %969 = vmatprep.subr.mxu0 0.0
        %970 = vmatpush1.msra.mxu0 0.0
        %971 = vmatprep.subr.mxu0 0.0
        %972 = vmatpush1.msra.mxu0 0.0
        %973 = vmatprep.subr.mxu0 0.0
        %974 = vmatpush1.msra.mxu0 0.0
        %975 = vmatprep.subr.mxu0 0.0
        %976 = vmatpush1.msra.mxu0 0.0
        %977 = vmatprep.subr.mxu0 0.0
        %978 = vmatpush1.msra.mxu0 0.0
        %979 = vmatprep.subr.mxu0 0.0
        %980 = vmatpush1.msra.mxu0 0.0
        %981 = vmatprep.subr.mxu0 0.0
        %982 = vmatpush1.msra.mxu0 0.0
        %983 = vmatprep.subr.mxu0 0.0
        %984 = vmatpush1.msra.mxu0 0.0
        %985 = vmatprep.subr.mxu0 0.0
        %986 = vmatpush1.msra.mxu0 0.0
        %987 = vmatprep.subr.mxu0 0.0
        %988 = vmatpush1.msra.mxu0 0.0
        %989 = vmatprep.subr.mxu0 0.0
        %990 = vmatpush1.msra.mxu0 0.0
        %991 = vmatprep.subr.mxu0 0.0
        %992 = vmatpush1.msra.mxu0 0.0
        %993 = vmatprep.subr.mxu0 0.0
        %994 = vmatpush1.msra.mxu0 0.0
        %995 = vmatprep.subr.mxu0 0.0
        %996 = vmatpush1.msra.mxu0 0.0
        %997 = vmatprep.subr.mxu0 0.0
        %998 = vmatpush1.msra.mxu0 0.0
        %999 = vmatprep.subr.mxu0 0.0
        %1000 = vmatpush1.msra.mxu0 0.0
        %1001 = vmatprep.subr.mxu0 0.0
        %1002 = vmatpush1.msra.mxu0 0.0
        %1003 = vmatprep.subr.mxu0 0.0
        %1004 = vmatpush1.msra.mxu0 0.0
        %1005 = vmatprep.subr.mxu0 0.0
        %1006 = vmatpush1.msra.mxu0 0.0
        %1007 = vmatprep.mubr.f32.mxu0 0.0
        %1008 = vmatmul.mubr.f32.gmra.mrb[0].mxu0 %v936
        %v1009 = vpop.f32.mrb[0].mxu0
        %v1010 = vadd.f32 0.0, %v1009
        %v1011 = vpop.f32.mrb[0].mxu0
        %1012 = vmatprep.mubr.f32.mxu0 0.0
        %1013 = vmatmul.mubr.f32.gmra.mrb[0].mxu0 %v938
        %v1014 = vpop.f32.mrb[0].mxu0
        %v1015 = vadd.f32 0.0, %v1014
        %v1016 = vpop.f32.mrb[0].mxu0
        %1017 = vdwg.mxu0
        %v1018 = vadd.f32 %v831, %v1010
        %v1019 = vadd.f32 %v832, %v1015
        %s1020 = scalar_lea.vmem %s182, 72
        %v1021 = vld [vmem:[%s1020] sm:$0xff]
        %v1022 = vld [vmem:[%s1020 + $0x8] sm:$0xff]
        %v1023 = vld [vmem:[%s1020 + $0x10] sm:$0x3]
        %s1024 = scalar_lea.vmem %s2, 216
        %v1025 = vld [vmem:[%s1024] sm:$0xff]
        %v1026 = vld [vmem:[%s1024 + $0x8] sm:$0xff]
        %v1027 = vld [vmem:[%s1024 + $0x10] sm:$0x3]
        %v1029 = vsel %vm206, %v1021, 0
        %v1032 = vsel %vm206, %v1022, 0
        %v1035 = vsel %vm211, %v1027, 0
        %1037 = vmatprep.subr.mxu0 0.0
        %1038 = vmatpush1.msra.mxu0 %v1025
        %1039 = vmatprep.subr.mxu0 0.0
        %1040 = vmatpush1.msra.mxu0 %v1026
        %1041 = vmatprep.subr.mxu0 0.0
        %1042 = vmatpush1.msra.mxu0 %v1035
        %1043 = vmatprep.subr.mxu0 0.0
        %1044 = vmatpush1.msra.mxu0 0.0
        %1045 = vmatprep.subr.mxu0 0.0
        %1046 = vmatpush1.msra.mxu0 0.0
        %1047 = vmatprep.subr.mxu0 0.0
        %1048 = vmatpush1.msra.mxu0 0.0
        %1049 = vmatprep.subr.mxu0 0.0
        %1050 = vmatpush1.msra.mxu0 0.0
        %1051 = vmatprep.subr.mxu0 0.0
        %1052 = vmatpush1.msra.mxu0 0.0
        %1053 = vmatprep.subr.mxu0 0.0
        %1054 = vmatpush1.msra.mxu0 0.0
        %1055 = vmatprep.subr.mxu0 0.0
        %1056 = vmatpush1.msra.mxu0 0.0
        %1057 = vmatprep.subr.mxu0 0.0
        %1058 = vmatpush1.msra.mxu0 0.0
        %1059 = vmatprep.subr.mxu0 0.0
        %1060 = vmatpush1.msra.mxu0 0.0
        %1061 = vmatprep.subr.mxu0 0.0
        %1062 = vmatpush1.msra.mxu0 0.0
        %1063 = vmatprep.subr.mxu0 0.0
        %1064 = vmatpush1.msra.mxu0 0.0
        %1065 = vmatprep.subr.mxu0 0.0
        %1066 = vmatpush1.msra.mxu0 0.0
        %1067 = vmatprep.subr.mxu0 0.0
        %1068 = vmatpush1.msra.mxu0 0.0
        %1069 = vmatprep.subr.mxu0 0.0
        %1070 = vmatpush1.msra.mxu0 0.0
        %1071 = vmatprep.subr.mxu0 0.0
        %1072 = vmatpush1.msra.mxu0 0.0
        %1073 = vmatprep.subr.mxu0 0.0
        %1074 = vmatpush1.msra.mxu0 0.0
        %1075 = vmatprep.subr.mxu0 0.0
        %1076 = vmatpush1.msra.mxu0 0.0
        %1077 = vmatprep.subr.mxu0 0.0
        %1078 = vmatpush1.msra.mxu0 0.0
        %1079 = vmatprep.subr.mxu0 0.0
        %1080 = vmatpush1.msra.mxu0 0.0
        %1081 = vmatprep.subr.mxu0 0.0
        %1082 = vmatpush1.msra.mxu0 0.0
        %1083 = vmatprep.subr.mxu0 0.0
        %1084 = vmatpush1.msra.mxu0 0.0
        %1085 = vmatprep.subr.mxu0 0.0
        %1086 = vmatpush1.msra.mxu0 0.0
        %1087 = vmatprep.subr.mxu0 0.0
        %1088 = vmatpush1.msra.mxu0 0.0
        %1089 = vmatprep.subr.mxu0 0.0
        %1090 = vmatpush1.msra.mxu0 0.0
        %1091 = vmatprep.subr.mxu0 0.0
        %1092 = vmatpush1.msra.mxu0 0.0
        %1093 = vmatprep.subr.mxu0 0.0
        %1094 = vmatpush1.msra.mxu0 0.0
        %1095 = vmatprep.subr.mxu0 0.0
        %1096 = vmatpush1.msra.mxu0 0.0
        %1097 = vmatprep.subr.mxu0 0.0
        %1098 = vmatpush1.msra.mxu0 0.0
        %1099 = vmatprep.subr.mxu0 0.0
        %1100 = vmatpush1.msra.mxu0 0.0
        %1101 = vmatprep.mubr.f32.mxu0 0.0
        %1102 = vmatmul.mubr.f32.gmra.mrb[0].mxu0 %v1029
        %v1103 = vpop.f32.mrb[0].mxu0
        %v1104 = vadd.f32 0.0, %v1103
        %v1105 = vpop.f32.mrb[0].mxu0
        %1106 = vmatprep.mubr.f32.mxu0 0.0
        %1107 = vmatmul.mubr.f32.gmra.mrb[0].mxu0 %v1032
        %v1108 = vpop.f32.mrb[0].mxu0
        %v1109 = vadd.f32 0.0, %v1108
        %v1110 = vpop.f32.mrb[0].mxu0
        %1111 = vdwg.mxu0
        %v1112 = vadd.f32 %v925, %v1104
        %v1113 = vadd.f32 %v926, %v1109
        %s1114 = scalar_lea.vmem %s2, 240
        %v1115 = vld [vmem:[%s1114] sm:$0xff]
        %v1116 = vld [vmem:[%s1114 + $0x8] sm:$0xff]
        %v1117 = vld [vmem:[%s1114 + $0x10] sm:$0x3]
        %v1119 = vrot.slane %v1021, 1
        %v1120 = vrot.slane %v1022, 1
        %v1121 = vsel %vm464, %v1119, %v1120
        %v1122 = vrot.slane %v1023, 1
        %v1123 = vsel %vm464, %v1120, %v1122
        %v1124 = vsel %vm206, %v1121, 0
        %v1126 = vsel %vm206, %v1123, 0
        %v1129 = vsel %vm211, %v1117, 0
        %1131 = vmatprep.subr.mxu0 0.0
        %1132 = vmatpush1.msra.mxu0 %v1115
        %1133 = vmatprep.subr.mxu0 0.0
        %1134 = vmatpush1.msra.mxu0 %v1116
        %1135 = vmatprep.subr.mxu0 0.0
        %1136 = vmatpush1.msra.mxu0 %v1129
        %1137 = vmatprep.subr.mxu0 0.0
        %1138 = vmatpush1.msra.mxu0 0.0
        %1139 = vmatprep.subr.mxu0 0.0
        %1140 = vmatpush1.msra.mxu0 0.0
        %1141 = vmatprep.subr.mxu0 0.0
        %1142 = vmatpush1.msra.mxu0 0.0
        %1143 = vmatprep.subr.mxu0 0.0
        %1144 = vmatpush1.msra.mxu0 0.0
        %1145 = vmatprep.subr.mxu0 0.0
        %1146 = vmatpush1.msra.mxu0 0.0
        %1147 = vmatprep.subr.mxu0 0.0
        %1148 = vmatpush1.msra.mxu0 0.0
        %1149 = vmatprep.subr.mxu0 0.0
        %1150 = vmatpush1.msra.mxu0 0.0
        %1151 = vmatprep.subr.mxu0 0.0
        %1152 = vmatpush1.msra.mxu0 0.0
        %1153 = vmatprep.subr.mxu0 0.0
        %1154 = vmatpush1.msra.mxu0 0.0
        %1155 = vmatprep.subr.mxu0 0.0
        %1156 = vmatpush1.msra.mxu0 0.0
        %1157 = vmatprep.subr.mxu0 0.0
        %1158 = vmatpush1.msra.mxu0 0.0
        %1159 = vmatprep.subr.mxu0 0.0
        %1160 = vmatpush1.msra.mxu0 0.0
        %1161 = vmatprep.subr.mxu0 0.0
        %1162 = vmatpush1.msra.mxu0 0.0
        %1163 = vmatprep.subr.mxu0 0.0
        %1164 = vmatpush1.msra.mxu0 0.0
        %1165 = vmatprep.subr.mxu0 0.0
        %1166 = vmatpush1.msra.mxu0 0.0
        %1167 = vmatprep.subr.mxu0 0.0
        %1168 = vmatpush1.msra.mxu0 0.0
        %1169 = vmatprep.subr.mxu0 0.0
        %1170 = vmatpush1.msra.mxu0 0.0
        %1171 = vmatprep.subr.mxu0 0.0
        %1172 = vmatpush1.msra.mxu0 0.0
        %1173 = vmatprep.subr.mxu0 0.0
        %1174 = vmatpush1.msra.mxu0 0.0
        %1175 = vmatprep.subr.mxu0 0.0
        %1176 = vmatpush1.msra.mxu0 0.0
        %1177 = vmatprep.subr.mxu0 0.0
        %1178 = vmatpush1.msra.mxu0 0.0
        %1179 = vmatprep.subr.mxu0 0.0
        %1180 = vmatpush1.msra.mxu0 0.0
        %1181 = vmatprep.subr.mxu0 0.0
        %1182 = vmatpush1.msra.mxu0 0.0
        %1183 = vmatprep.subr.mxu0 0.0
        %1184 = vmatpush1.msra.mxu0 0.0
        %1185 = vmatprep.subr.mxu0 0.0
        %1186 = vmatpush1.msra.mxu0 0.0
        %1187 = vmatprep.subr.mxu0 0.0
        %1188 = vmatpush1.msra.mxu0 0.0
        %1189 = vmatprep.subr.mxu0 0.0
        %1190 = vmatpush1.msra.mxu0 0.0
        %1191 = vmatprep.subr.mxu0 0.0
        %1192 = vmatpush1.msra.mxu0 0.0
        %1193 = vmatprep.subr.mxu0 0.0
        %1194 = vmatpush1.msra.mxu0 0.0
        %1195 = vmatprep.mubr.f32.mxu0 0.0
        %1196 = vmatmul.mubr.f32.gmra.mrb[0].mxu0 %v1124
        %v1197 = vpop.f32.mrb[0].mxu0
        %v1198 = vadd.f32 0.0, %v1197
        %v1199 = vpop.f32.mrb[0].mxu0
        %1200 = vmatprep.mubr.f32.mxu0 0.0
        %1201 = vmatmul.mubr.f32.gmra.mrb[0].mxu0 %v1126
        %v1202 = vpop.f32.mrb[0].mxu0
        %v1203 = vadd.f32 0.0, %v1202
        %v1204 = vpop.f32.mrb[0].mxu0
        %1205 = vdwg.mxu0
        %v1206 = vadd.f32 %v1018, %v1198
        %v1207 = vadd.f32 %v1019, %v1203
        %s1208 = scalar_lea.vmem %s2, 264
        %v1209 = vld [vmem:[%s1208] sm:$0xff]
        %v1210 = vld [vmem:[%s1208 + $0x8] sm:$0xff]
        %v1211 = vld [vmem:[%s1208 + $0x10] sm:$0x3]
        %v1212 = vrot.slane %v1021, 2
        %v1213 = vrot.slane %v1022, 2
        %v1214 = vsel %vm200, %v1212, %v1213
        %v1215 = vrot.slane %v1023, 2
        %v1216 = vsel %vm200, %v1213, %v1215
        %v1217 = vsel %vm206, %v1214, 0
        %v1219 = vsel %vm206, %v1216, 0
        %v1222 = vsel %vm211, %v1211, 0
        %1224 = vmatprep.subr.mxu0 0.0
        %1225 = vmatpush1.msra.mxu0 %v1209
        %1226 = vmatprep.subr.mxu0 0.0
        %1227 = vmatpush1.msra.mxu0 %v1210
        %1228 = vmatprep.subr.mxu0 0.0
        %1229 = vmatpush1.msra.mxu0 %v1222
        %1230 = vmatprep.subr.mxu0 0.0
        %1231 = vmatpush1.msra.mxu0 0.0
        %1232 = vmatprep.subr.mxu0 0.0
        %1233 = vmatpush1.msra.mxu0 0.0
        %1234 = vmatprep.subr.mxu0 0.0
        %1235 = vmatpush1.msra.mxu0 0.0
        %1236 = vmatprep.subr.mxu0 0.0
        %1237 = vmatpush1.msra.mxu0 0.0
        %1238 = vmatprep.subr.mxu0 0.0
        %1239 = vmatpush1.msra.mxu0 0.0
        %1240 = vmatprep.subr.mxu0 0.0
        %1241 = vmatpush1.msra.mxu0 0.0
        %1242 = vmatprep.subr.mxu0 0.0
        %1243 = vmatpush1.msra.mxu0 0.0
        %1244 = vmatprep.subr.mxu0 0.0
        %1245 = vmatpush1.msra.mxu0 0.0
        %1246 = vmatprep.subr.mxu0 0.0
        %1247 = vmatpush1.msra.mxu0 0.0
        %1248 = vmatprep.subr.mxu0 0.0
        %1249 = vmatpush1.msra.mxu0 0.0
        %1250 = vmatprep.subr.mxu0 0.0
        %1251 = vmatpush1.msra.mxu0 0.0
        %1252 = vmatprep.subr.mxu0 0.0
        %1253 = vmatpush1.msra.mxu0 0.0
        %1254 = vmatprep.subr.mxu0 0.0
        %1255 = vmatpush1.msra.mxu0 0.0
        %1256 = vmatprep.subr.mxu0 0.0
        %1257 = vmatpush1.msra.mxu0 0.0
        %1258 = vmatprep.subr.mxu0 0.0
        %1259 = vmatpush1.msra.mxu0 0.0
        %1260 = vmatprep.subr.mxu0 0.0
        %1261 = vmatpush1.msra.mxu0 0.0
        %1262 = vmatprep.subr.mxu0 0.0
        %1263 = vmatpush1.msra.mxu0 0.0
        %1264 = vmatprep.subr.mxu0 0.0
        %1265 = vmatpush1.msra.mxu0 0.0
        %1266 = vmatprep.subr.mxu0 0.0
        %1267 = vmatpush1.msra.mxu0 0.0
        %1268 = vmatprep.subr.mxu0 0.0
        %1269 = vmatpush1.msra.mxu0 0.0
        %1270 = vmatprep.subr.mxu0 0.0
        %1271 = vmatpush1.msra.mxu0 0.0
        %1272 = vmatprep.subr.mxu0 0.0
        %1273 = vmatpush1.msra.mxu0 0.0
        %1274 = vmatprep.subr.mxu0 0.0
        %1275 = vmatpush1.msra.mxu0 0.0
        %1276 = vmatprep.subr.mxu0 0.0
        %1277 = vmatpush1.msra.mxu0 0.0
        %1278 = vmatprep.subr.mxu0 0.0
        %1279 = vmatpush1.msra.mxu0 0.0
        %1280 = vmatprep.subr.mxu0 0.0
        %1281 = vmatpush1.msra.mxu0 0.0
        %1282 = vmatprep.subr.mxu0 0.0
        %1283 = vmatpush1.msra.mxu0 0.0
        %1284 = vmatprep.subr.mxu0 0.0
        %1285 = vmatpush1.msra.mxu0 0.0
        %1286 = vmatprep.subr.mxu0 0.0
        %1287 = vmatpush1.msra.mxu0 0.0
        %1288 = vmatprep.mubr.f32.mxu0 0.0
        %1289 = vmatmul.mubr.f32.gmra.mrb[0].mxu0 %v1217
        %v1290 = vpop.f32.mrb[0].mxu0
        %v1291 = vadd.f32 0.0, %v1290
        %v1292 = vpop.f32.mrb[0].mxu0
        %1293 = vmatprep.mubr.f32.mxu0 0.0
        %1294 = vmatmul.mubr.f32.gmra.mrb[0].mxu0 %v1219
        %v1295 = vpop.f32.mrb[0].mxu0
        %v1296 = vadd.f32 0.0, %v1295
        %v1297 = vpop.f32.mrb[0].mxu0
        %1298 = vdwg.mxu0
        %v1299 = vadd.f32 %v1112, %v1291
        %v1300 = vadd.f32 %v1113, %v1296
        %s1301 = sld [smem:[#allocation2]]
        %s1302 = sld [smem:[#allocation2 + $0x1]]
        %v1303 = vadd.f32 %v1206, %v1299
        %v1304 = vadd.f32 %v1207, %v1300
        %v1305 = vstv %s1301
        %v1306 = vmul.f32 %v1303, %v1305
        %v1307 = vmul.f32 %v1304, %v1305
        %v1308 = vstv %s1302
        %v1309 = vadd.f32 %v1306, %v1308
        %v1310 = vadd.f32 %v1307, %v1308
        %v1311 = vmax.f32 %v1309, 0.0
        %v1312 = vmax.f32 %v1310, 0.0
        %vm1313 = vcmask 130048
        %1314 = vst.msk [vmem:[%s177] sm:$0xff] %vm1313, %v1311
        %1315 = vst.msk [vmem:[%s177 + $0x8] sm:$0xff] %vm1313, %v1312
        %v1316 = vld [vmem:[%s182] sm:$0xff]
        %v1317 = vld [vmem:[%s182 + $0x8] sm:$0xff]
        %v1318 = vld [vmem:[%s182 + $0x10] sm:$0x3]
        %s1319 = scalar_lea.vmem %s2, 288
        %v1320 = vld [vmem:[%s1319] sm:$0xff]
        %v1321 = vld [vmem:[%s1319 + $0x8] sm:$0xff]
        %v1322 = vld [vmem:[%s1319 + $0x10] sm:$0x3]
        %s1323 = scalar_lea.vmem %s2, 312
        %v1324 = vld [vmem:[%s1323] sm:$0xff]
        %v1325 = vld [vmem:[%s1323 + $0x8] sm:$0xff]
        %v1326 = vld [vmem:[%s1323 + $0x10] sm:$0x3]
        %s1327 = scalar_lea.vmem %s2, 336
        %v1328 = vld [vmem:[%s1327] sm:$0xff]
        %v1329 = vld [vmem:[%s1327 + $0x8] sm:$0xff]
        %v1330 = vld [vmem:[%s1327 + $0x10] sm:$0x3]
        %v1334 = vrot.slane %v1316, 2
        %v1335 = vrot.slane %v1317, 2
        %v1336 = vsel %vm200, %v1334, %v1335
        %v1337 = vrot.slane %v1318, 2
        %v1338 = vsel %vm200, %v1335, %v1337
        %v1339 = vsel %vm206, %v1336, 0
        %v1341 = vsel %vm206, %v1338, 0
        %v1344 = vsel %vm211, %v1330, 0
        %1346 = vmatprep.subr.mxu0 0.0
        %1347 = vmatpush1.msra.mxu0 %v1328
        %1348 = vmatprep.subr.mxu0 0.0
        %1349 = vmatpush1.msra.mxu0 %v1329
        %1350 = vmatprep.subr.mxu0 0.0
        %1351 = vmatpush1.msra.mxu0 %v1344
        %1352 = vmatprep.subr.mxu0 0.0
        %1353 = vmatpush1.msra.mxu0 0.0
        %1354 = vmatprep.subr.mxu0 0.0
        %1355 = vmatpush1.msra.mxu0 0.0
        %1356 = vmatprep.subr.mxu0 0.0
        %1357 = vmatpush1.msra.mxu0 0.0
        %1358 = vmatprep.subr.mxu0 0.0
        %1359 = vmatpush1.msra.mxu0 0.0
        %1360 = vmatprep.subr.mxu0 0.0
        %1361 = vmatpush1.msra.mxu0 0.0
        %1362 = vmatprep.subr.mxu0 0.0
        %1363 = vmatpush1.msra.mxu0 0.0
        %1364 = vmatprep.subr.mxu0 0.0
        %1365 = vmatpush1.msra.mxu0 0.0
        %1366 = vmatprep.subr.mxu0 0.0
        %1367 = vmatpush1.msra.mxu0 0.0
        %1368 = vmatprep.subr.mxu0 0.0
        %1369 = vmatpush1.msra.mxu0 0.0
        %1370 = vmatprep.subr.mxu0 0.0
        %1371 = vmatpush1.msra.mxu0 0.0
        %1372 = vmatprep.subr.mxu0 0.0
        %1373 = vmatpush1.msra.mxu0 0.0
        %1374 = vmatprep.subr.mxu0 0.0
        %1375 = vmatpush1.msra.mxu0 0.0
        %1376 = vmatprep.subr.mxu0 0.0
        %1377 = vmatpush1.msra.mxu0 0.0
        %1378 = vmatprep.subr.mxu0 0.0
        %1379 = vmatpush1.msra.mxu0 0.0
        %1380 = vmatprep.subr.mxu0 0.0
        %1381 = vmatpush1.msra.mxu0 0.0
        %1382 = vmatprep.subr.mxu0 0.0
        %1383 = vmatpush1.msra.mxu0 0.0
        %1384 = vmatprep.subr.mxu0 0.0
        %1385 = vmatpush1.msra.mxu0 0.0
        %1386 = vmatprep.subr.mxu0 0.0
        %1387 = vmatpush1.msra.mxu0 0.0
        %1388 = vmatprep.subr.mxu0 0.0
        %1389 = vmatpush1.msra.mxu0 0.0
        %1390 = vmatprep.subr.mxu0 0.0
        %1391 = vmatpush1.msra.mxu0 0.0
        %1392 = vmatprep.subr.mxu0 0.0
        %1393 = vmatpush1.msra.mxu0 0.0
        %1394 = vmatprep.subr.mxu0 0.0
        %1395 = vmatpush1.msra.mxu0 0.0
        %1396 = vmatprep.subr.mxu0 0.0
        %1397 = vmatpush1.msra.mxu0 0.0
        %1398 = vmatprep.subr.mxu0 0.0
        %1399 = vmatpush1.msra.mxu0 0.0
        %1400 = vmatprep.subr.mxu0 0.0
        %1401 = vmatpush1.msra.mxu0 0.0
        %1402 = vmatprep.subr.mxu0 0.0
        %1403 = vmatpush1.msra.mxu0 0.0
        %1404 = vmatprep.subr.mxu0 0.0
        %1405 = vmatpush1.msra.mxu0 0.0
        %1406 = vmatprep.subr.mxu0 0.0
        %1407 = vmatpush1.msra.mxu0 0.0
        %1408 = vmatprep.subr.mxu0 0.0
        %1409 = vmatpush1.msra.mxu0 0.0
        %1410 = vmatprep.mubr.f32.mxu0 0.0
        %1411 = vmatmul.mubr.f32.gmra.mrb[0].mxu0 %v1339
        %v1412 = vpop.f32.mrb[0].mxu0
        %v1413 = vadd.f32 0.0, %v1412
        %v1414 = vpop.f32.mrb[0].mxu0
        %1415 = vmatprep.mubr.f32.mxu0 0.0
        %1416 = vmatmul.mubr.f32.gmra.mrb[0].mxu0 %v1341
        %v1417 = vpop.f32.mrb[0].mxu0
        %v1418 = vadd.f32 0.0, %v1417
        %v1419 = vpop.f32.mrb[0].mxu0
        %1420 = vdwg.mxu0
        %v1421 = vsel %vm206, %v1316, 0
        %v1423 = vsel %vm206, %v1317, 0
        %v1426 = vsel %vm211, %v1322, 0
        %1428 = vmatprep.subr.mxu0 0.0
        %1429 = vmatpush1.msra.mxu0 %v1320
        %1430 = vmatprep.subr.mxu0 0.0
        %1431 = vmatpush1.msra.mxu0 %v1321
        %1432 = vmatprep.subr.mxu0 0.0
        %1433 = vmatpush1.msra.mxu0 %v1426
        %1434 = vmatprep.subr.mxu0 0.0
        %1435 = vmatpush1.msra.mxu0 0.0
        %1436 = vmatprep.subr.mxu0 0.0
        %1437 = vmatpush1.msra.mxu0 0.0
        %1438 = vmatprep.subr.mxu0 0.0
        %1439 = vmatpush1.msra.mxu0 0.0
        %1440 = vmatprep.subr.mxu0 0.0
        %1441 = vmatpush1.msra.mxu0 0.0
        %1442 = vmatprep.subr.mxu0 0.0
        %1443 = vmatpush1.msra.mxu0 0.0
        %1444 = vmatprep.subr.mxu0 0.0
        %1445 = vmatpush1.msra.mxu0 0.0
        %1446 = vmatprep.subr.mxu0 0.0
        %1447 = vmatpush1.msra.mxu0 0.0
        %1448 = vmatprep.subr.mxu0 0.0
        %1449 = vmatpush1.msra.mxu0 0.0
        %1450 = vmatprep.subr.mxu0 0.0
        %1451 = vmatpush1.msra.mxu0 0.0
        %1452 = vmatprep.subr.mxu0 0.0
        %1453 = vmatpush1.msra.mxu0 0.0
        %1454 = vmatprep.subr.mxu0 0.0
        %1455 = vmatpush1.msra.mxu0 0.0
        %1456 = vmatprep.subr.mxu0 0.0
        %1457 = vmatpush1.msra.mxu0 0.0
        %1458 = vmatprep.subr.mxu0 0.0
        %1459 = vmatpush1.msra.mxu0 0.0
        %1460 = vmatprep.subr.mxu0 0.0
        %1461 = vmatpush1.msra.mxu0 0.0
        %1462 = vmatprep.subr.mxu0 0.0
        %1463 = vmatpush1.msra.mxu0 0.0
        %1464 = vmatprep.subr.mxu0 0.0
        %1465 = vmatpush1.msra.mxu0 0.0
        %1466 = vmatprep.subr.mxu0 0.0
        %1467 = vmatpush1.msra.mxu0 0.0
        %1468 = vmatprep.subr.mxu0 0.0
        %1469 = vmatpush1.msra.mxu0 0.0
        %1470 = vmatprep.subr.mxu0 0.0
        %1471 = vmatpush1.msra.mxu0 0.0
        %1472 = vmatprep.subr.mxu0 0.0
        %1473 = vmatpush1.msra.mxu0 0.0
        %1474 = vmatprep.subr.mxu0 0.0
        %1475 = vmatpush1.msra.mxu0 0.0
        %1476 = vmatprep.subr.mxu0 0.0
        %1477 = vmatpush1.msra.mxu0 0.0
        %1478 = vmatprep.subr.mxu0 0.0
        %1479 = vmatpush1.msra.mxu0 0.0
        %1480 = vmatprep.subr.mxu0 0.0
        %1481 = vmatpush1.msra.mxu0 0.0
        %1482 = vmatprep.subr.mxu0 0.0
        %1483 = vmatpush1.msra.mxu0 0.0
        %1484 = vmatprep.subr.mxu0 0.0
        %1485 = vmatpush1.msra.mxu0 0.0
        %1486 = vmatprep.subr.mxu0 0.0
        %1487 = vmatpush1.msra.mxu0 0.0
        %1488 = vmatprep.subr.mxu0 0.0
        %1489 = vmatpush1.msra.mxu0 0.0
        %1490 = vmatprep.subr.mxu0 0.0
        %1491 = vmatpush1.msra.mxu0 0.0
        %1492 = vmatprep.mubr.f32.mxu0 0.0
        %1493 = vmatmul.mubr.f32.gmra.mrb[0].mxu0 %v1421
        %v1494 = vpop.f32.mrb[0].mxu0
        %v1495 = vadd.f32 %v1413, %v1494
        %v1496 = vpop.f32.mrb[0].mxu0
        %1497 = vmatprep.mubr.f32.mxu0 0.0
        %1498 = vmatmul.mubr.f32.gmra.mrb[0].mxu0 %v1423
        %v1499 = vpop.f32.mrb[0].mxu0
        %v1500 = vadd.f32 %v1418, %v1499
        %v1501 = vpop.f32.mrb[0].mxu0
        %1502 = vdwg.mxu0
        %v1503 = vld [vmem:[%s372] sm:$0xff]
        %v1504 = vld [vmem:[%s372 + $0x8] sm:$0xff]
        %v1505 = vld [vmem:[%s372 + $0x10] sm:$0x3]
        %s1506 = scalar_lea.vmem %s2, 360
        %v1507 = vld [vmem:[%s1506] sm:$0xff]
        %v1508 = vld [vmem:[%s1506 + $0x8] sm:$0xff]
        %v1509 = vld [vmem:[%s1506 + $0x10] sm:$0x3]
        %v1511 = vsel %vm206, %v1503, 0
        %v1514 = vsel %vm206, %v1504, 0
        %v1517 = vsel %vm211, %v1509, 0
        %1519 = vmatprep.subr.mxu0 0.0
        %1520 = vmatpush1.msra.mxu0 %v1507
        %1521 = vmatprep.subr.mxu0 0.0
        %1522 = vmatpush1.msra.mxu0 %v1508
        %1523 = vmatprep.subr.mxu0 0.0
        %1524 = vmatpush1.msra.mxu0 %v1517
        %1525 = vmatprep.subr.mxu0 0.0
        %1526 = vmatpush1.msra.mxu0 0.0
        %1527 = vmatprep.subr.mxu0 0.0
        %1528 = vmatpush1.msra.mxu0 0.0
        %1529 = vmatprep.subr.mxu0 0.0
        %1530 = vmatpush1.msra.mxu0 0.0
        %1531 = vmatprep.subr.mxu0 0.0
        %1532 = vmatpush1.msra.mxu0 0.0
        %1533 = vmatprep.subr.mxu0 0.0
        %1534 = vmatpush1.msra.mxu0 0.0
        %1535 = vmatprep.subr.mxu0 0.0
        %1536 = vmatpush1.msra.mxu0 0.0
        %1537 = vmatprep.subr.mxu0 0.0
        %1538 = vmatpush1.msra.mxu0 0.0
        %1539 = vmatprep.subr.mxu0 0.0
        %1540 = vmatpush1.msra.mxu0 0.0
        %1541 = vmatprep.subr.mxu0 0.0
        %1542 = vmatpush1.msra.mxu0 0.0
        %1543 = vmatprep.subr.mxu0 0.0
        %1544 = vmatpush1.msra.mxu0 0.0
        %1545 = vmatprep.subr.mxu0 0.0
        %1546 = vmatpush1.msra.mxu0 0.0
        %1547 = vmatprep.subr.mxu0 0.0
        %1548 = vmatpush1.msra.mxu0 0.0
        %1549 = vmatprep.subr.mxu0 0.0
        %1550 = vmatpush1.msra.mxu0 0.0
        %1551 = vmatprep.subr.mxu0 0.0
        %1552 = vmatpush1.msra.mxu0 0.0
        %1553 = vmatprep.subr.mxu0 0.0
        %1554 = vmatpush1.msra.mxu0 0.0
        %1555 = vmatprep.subr.mxu0 0.0
        %1556 = vmatpush1.msra.mxu0 0.0
        %1557 = vmatprep.subr.mxu0 0.0
        %1558 = vmatpush1.msra.mxu0 0.0
        %1559 = vmatprep.subr.mxu0 0.0
        %1560 = vmatpush1.msra.mxu0 0.0
        %1561 = vmatprep.subr.mxu0 0.0
        %1562 = vmatpush1.msra.mxu0 0.0
        %1563 = vmatprep.subr.mxu0 0.0
        %1564 = vmatpush1.msra.mxu0 0.0
        %1565 = vmatprep.subr.mxu0 0.0
        %1566 = vmatpush1.msra.mxu0 0.0
        %1567 = vmatprep.subr.mxu0 0.0
        %1568 = vmatpush1.msra.mxu0 0.0
        %1569 = vmatprep.subr.mxu0 0.0
        %1570 = vmatpush1.msra.mxu0 0.0
        %1571 = vmatprep.subr.mxu0 0.0
        %1572 = vmatpush1.msra.mxu0 0.0
        %1573 = vmatprep.subr.mxu0 0.0
        %1574 = vmatpush1.msra.mxu0 0.0
        %1575 = vmatprep.subr.mxu0 0.0
        %1576 = vmatpush1.msra.mxu0 0.0
        %1577 = vmatprep.subr.mxu0 0.0
        %1578 = vmatpush1.msra.mxu0 0.0
        %1579 = vmatprep.subr.mxu0 0.0
        %1580 = vmatpush1.msra.mxu0 0.0
        %1581 = vmatprep.subr.mxu0 0.0
        %1582 = vmatpush1.msra.mxu0 0.0
        %1583 = vmatprep.mubr.f32.mxu0 0.0
        %1584 = vmatmul.mubr.f32.gmra.mrb[0].mxu0 %v1511
        %v1585 = vpop.f32.mrb[0].mxu0
        %v1586 = vadd.f32 0.0, %v1585
        %v1587 = vpop.f32.mrb[0].mxu0
        %1588 = vmatprep.mubr.f32.mxu0 0.0
        %1589 = vmatmul.mubr.f32.gmra.mrb[0].mxu0 %v1514
        %v1590 = vpop.f32.mrb[0].mxu0
        %v1591 = vadd.f32 0.0, %v1590
        %v1592 = vpop.f32.mrb[0].mxu0
        %1593 = vdwg.mxu0
        %v1594 = vrot.slane %v1316, 1
        %v1595 = vrot.slane %v1317, 1
        %v1596 = vsel %vm464, %v1594, %v1595
        %v1597 = vrot.slane %v1318, 1
        %v1598 = vsel %vm464, %v1595, %v1597
        %v1599 = vsel %vm206, %v1596, 0
        %v1601 = vsel %vm206, %v1598, 0
        %v1604 = vsel %vm211, %v1326, 0
        %1606 = vmatprep.subr.mxu0 0.0
        %1607 = vmatpush1.msra.mxu0 %v1324
        %1608 = vmatprep.subr.mxu0 0.0
        %1609 = vmatpush1.msra.mxu0 %v1325
        %1610 = vmatprep.subr.mxu0 0.0
        %1611 = vmatpush1.msra.mxu0 %v1604
        %1612 = vmatprep.subr.mxu0 0.0
        %1613 = vmatpush1.msra.mxu0 0.0
        %1614 = vmatprep.subr.mxu0 0.0
        %1615 = vmatpush1.msra.mxu0 0.0
        %1616 = vmatprep.subr.mxu0 0.0
        %1617 = vmatpush1.msra.mxu0 0.0
        %1618 = vmatprep.subr.mxu0 0.0
        %1619 = vmatpush1.msra.mxu0 0.0
        %1620 = vmatprep.subr.mxu0 0.0
        %1621 = vmatpush1.msra.mxu0 0.0
        %1622 = vmatprep.subr.mxu0 0.0
        %1623 = vmatpush1.msra.mxu0 0.0
        %1624 = vmatprep.subr.mxu0 0.0
        %1625 = vmatpush1.msra.mxu0 0.0
        %1626 = vmatprep.subr.mxu0 0.0
        %1627 = vmatpush1.msra.mxu0 0.0
        %1628 = vmatprep.subr.mxu0 0.0
        %1629 = vmatpush1.msra.mxu0 0.0
        %1630 = vmatprep.subr.mxu0 0.0
        %1631 = vmatpush1.msra.mxu0 0.0
        %1632 = vmatprep.subr.mxu0 0.0
        %1633 = vmatpush1.msra.mxu0 0.0
        %1634 = vmatprep.subr.mxu0 0.0
        %1635 = vmatpush1.msra.mxu0 0.0
        %1636 = vmatprep.subr.mxu0 0.0
        %1637 = vmatpush1.msra.mxu0 0.0
        %1638 = vmatprep.subr.mxu0 0.0
        %1639 = vmatpush1.msra.mxu0 0.0
        %1640 = vmatprep.subr.mxu0 0.0
        %1641 = vmatpush1.msra.mxu0 0.0
        %1642 = vmatprep.subr.mxu0 0.0
        %1643 = vmatpush1.msra.mxu0 0.0
        %1644 = vmatprep.subr.mxu0 0.0
        %1645 = vmatpush1.msra.mxu0 0.0
        %1646 = vmatprep.subr.mxu0 0.0
        %1647 = vmatpush1.msra.mxu0 0.0
        %1648 = vmatprep.subr.mxu0 0.0
        %1649 = vmatpush1.msra.mxu0 0.0
        %1650 = vmatprep.subr.mxu0 0.0
        %1651 = vmatpush1.msra.mxu0 0.0
        %1652 = vmatprep.subr.mxu0 0.0
        %1653 = vmatpush1.msra.mxu0 0.0
        %1654 = vmatprep.subr.mxu0 0.0
        %1655 = vmatpush1.msra.mxu0 0.0
        %1656 = vmatprep.subr.mxu0 0.0
        %1657 = vmatpush1.msra.mxu0 0.0
        %1658 = vmatprep.subr.mxu0 0.0
        %1659 = vmatpush1.msra.mxu0 0.0
        %1660 = vmatprep.subr.mxu0 0.0
        %1661 = vmatpush1.msra.mxu0 0.0
        %1662 = vmatprep.subr.mxu0 0.0
        %1663 = vmatpush1.msra.mxu0 0.0
        %1664 = vmatprep.subr.mxu0 0.0
        %1665 = vmatpush1.msra.mxu0 0.0
        %1666 = vmatprep.subr.mxu0 0.0
        %1667 = vmatpush1.msra.mxu0 0.0
        %1668 = vmatprep.subr.mxu0 0.0
        %1669 = vmatpush1.msra.mxu0 0.0
        %1670 = vmatprep.mubr.f32.mxu0 0.0
        %1671 = vmatmul.mubr.f32.gmra.mrb[0].mxu0 %v1599
        %v1672 = vpop.f32.mrb[0].mxu0
        %v1673 = vadd.f32 %v1586, %v1672
        %v1674 = vpop.f32.mrb[0].mxu0
        %1675 = vmatprep.mubr.f32.mxu0 0.0
        %1676 = vmatmul.mubr.f32.gmra.mrb[0].mxu0 %v1601
        %v1677 = vpop.f32.mrb[0].mxu0
        %v1678 = vadd.f32 %v1591, %v1677
        %v1679 = vpop.f32.mrb[0].mxu0
        %1680 = vdwg.mxu0
        %s1681 = scalar_lea.vmem %s2, 384
        %v1682 = vld [vmem:[%s1681] sm:$0xff]
        %v1683 = vld [vmem:[%s1681 + $0x8] sm:$0xff]
        %v1684 = vld [vmem:[%s1681 + $0x10] sm:$0x3]
        %v1686 = vrot.slane %v1503, 1
        %v1687 = vrot.slane %v1504, 1
        %v1688 = vsel %vm464, %v1686, %v1687
        %v1689 = vrot.slane %v1505, 1
        %v1690 = vsel %vm464, %v1687, %v1689
        %v1691 = vsel %vm206, %v1688, 0
        %v1693 = vsel %vm206, %v1690, 0
        %v1696 = vsel %vm211, %v1684, 0
        %1698 = vmatprep.subr.mxu0 0.0
        %1699 = vmatpush1.msra.mxu0 %v1682
        %1700 = vmatprep.subr.mxu0 0.0
        %1701 = vmatpush1.msra.mxu0 %v1683
        %1702 = vmatprep.subr.mxu0 0.0
        %1703 = vmatpush1.msra.mxu0 %v1696
        %1704 = vmatprep.subr.mxu0 0.0
        %1705 = vmatpush1.msra.mxu0 0.0
        %1706 = vmatprep.subr.mxu0 0.0
        %1707 = vmatpush1.msra.mxu0 0.0
        %1708 = vmatprep.subr.mxu0 0.0
        %1709 = vmatpush1.msra.mxu0 0.0
        %1710 = vmatprep.subr.mxu0 0.0
        %1711 = vmatpush1.msra.mxu0 0.0
        %1712 = vmatprep.subr.mxu0 0.0
        %1713 = vmatpush1.msra.mxu0 0.0
        %1714 = vmatprep.subr.mxu0 0.0
        %1715 = vmatpush1.msra.mxu0 0.0
        %1716 = vmatprep.subr.mxu0 0.0
        %1717 = vmatpush1.msra.mxu0 0.0
        %1718 = vmatprep.subr.mxu0 0.0
        %1719 = vmatpush1.msra.mxu0 0.0
        %1720 = vmatprep.subr.mxu0 0.0
        %1721 = vmatpush1.msra.mxu0 0.0
        %1722 = vmatprep.subr.mxu0 0.0
        %1723 = vmatpush1.msra.mxu0 0.0
        %1724 = vmatprep.subr.mxu0 0.0
        %1725 = vmatpush1.msra.mxu0 0.0
        %1726 = vmatprep.subr.mxu0 0.0
        %1727 = vmatpush1.msra.mxu0 0.0
        %1728 = vmatprep.subr.mxu0 0.0
        %1729 = vmatpush1.msra.mxu0 0.0
        %1730 = vmatprep.subr.mxu0 0.0
        %1731 = vmatpush1.msra.mxu0 0.0
        %1732 = vmatprep.subr.mxu0 0.0
        %1733 = vmatpush1.msra.mxu0 0.0
        %1734 = vmatprep.subr.mxu0 0.0
        %1735 = vmatpush1.msra.mxu0 0.0
        %1736 = vmatprep.subr.mxu0 0.0
        %1737 = vmatpush1.msra.mxu0 0.0
        %1738 = vmatprep.subr.mxu0 0.0
        %1739 = vmatpush1.msra.mxu0 0.0
        %1740 = vmatprep.subr.mxu0 0.0
        %1741 = vmatpush1.msra.mxu0 0.0
        %1742 = vmatprep.subr.mxu0 0.0
        %1743 = vmatpush1.msra.mxu0 0.0
        %1744 = vmatprep.subr.mxu0 0.0
        %1745 = vmatpush1.msra.mxu0 0.0
        %1746 = vmatprep.subr.mxu0 0.0
        %1747 = vmatpush1.msra.mxu0 0.0
        %1748 = vmatprep.subr.mxu0 0.0
        %1749 = vmatpush1.msra.mxu0 0.0
        %1750 = vmatprep.subr.mxu0 0.0
        %1751 = vmatpush1.msra.mxu0 0.0
        %1752 = vmatprep.subr.mxu0 0.0
        %1753 = vmatpush1.msra.mxu0 0.0
        %1754 = vmatprep.subr.mxu0 0.0
        %1755 = vmatpush1.msra.mxu0 0.0
        %1756 = vmatprep.subr.mxu0 0.0
        %1757 = vmatpush1.msra.mxu0 0.0
        %1758 = vmatprep.subr.mxu0 0.0
        %1759 = vmatpush1.msra.mxu0 0.0
        %1760 = vmatprep.subr.mxu0 0.0
        %1761 = vmatpush1.msra.mxu0 0.0
        %1762 = vmatprep.mubr.f32.mxu0 0.0
        %1763 = vmatmul.mubr.f32.gmra.mrb[0].mxu0 %v1691
        %v1764 = vpop.f32.mrb[0].mxu0
        %v1765 = vadd.f32 0.0, %v1764
        %v1766 = vpop.f32.mrb[0].mxu0
        %1767 = vmatprep.mubr.f32.mxu0 0.0
        %1768 = vmatmul.mubr.f32.gmra.mrb[0].mxu0 %v1693
        %v1769 = vpop.f32.mrb[0].mxu0
        %v1770 = vadd.f32 0.0, %v1769
        %v1771 = vpop.f32.mrb[0].mxu0
        %1772 = vdwg.mxu0
        %v1773 = vadd.f32 %v1495, %v1765
        %v1774 = vadd.f32 %v1500, %v1770
        %s1775 = scalar_lea.vmem %s2, 408
        %v1776 = vld [vmem:[%s1775] sm:$0xff]
        %v1777 = vld [vmem:[%s1775 + $0x8] sm:$0xff]
        %v1778 = vld [vmem:[%s1775 + $0x10] sm:$0x3]
        %v1779 = vrot.slane %v1503, 2
        %v1780 = vrot.slane %v1504, 2
        %v1781 = vsel %vm200, %v1779, %v1780
        %v1782 = vrot.slane %v1505, 2
        %v1783 = vsel %vm200, %v1780, %v1782
        %v1784 = vsel %vm206, %v1781, 0
        %v1786 = vsel %vm206, %v1783, 0
        %v1789 = vsel %vm211, %v1778, 0
        %1791 = vmatprep.subr.mxu0 0.0
        %1792 = vmatpush1.msra.mxu0 %v1776
        %1793 = vmatprep.subr.mxu0 0.0
        %1794 = vmatpush1.msra.mxu0 %v1777
        %1795 = vmatprep.subr.mxu0 0.0
        %1796 = vmatpush1.msra.mxu0 %v1789
        %1797 = vmatprep.subr.mxu0 0.0
        %1798 = vmatpush1.msra.mxu0 0.0
        %1799 = vmatprep.subr.mxu0 0.0
        %1800 = vmatpush1.msra.mxu0 0.0
        %1801 = vmatprep.subr.mxu0 0.0
        %1802 = vmatpush1.msra.mxu0 0.0
        %1803 = vmatprep.subr.mxu0 0.0
        %1804 = vmatpush1.msra.mxu0 0.0
        %1805 = vmatprep.subr.mxu0 0.0
        %1806 = vmatpush1.msra.mxu0 0.0
        %1807 = vmatprep.subr.mxu0 0.0
        %1808 = vmatpush1.msra.mxu0 0.0
        %1809 = vmatprep.subr.mxu0 0.0
        %1810 = vmatpush1.msra.mxu0 0.0
        %1811 = vmatprep.subr.mxu0 0.0
        %1812 = vmatpush1.msra.mxu0 0.0
        %1813 = vmatprep.subr.mxu0 0.0
        %1814 = vmatpush1.msra.mxu0 0.0
        %1815 = vmatprep.subr.mxu0 0.0
        %1816 = vmatpush1.msra.mxu0 0.0
        %1817 = vmatprep.subr.mxu0 0.0
        %1818 = vmatpush1.msra.mxu0 0.0
        %1819 = vmatprep.subr.mxu0 0.0
        %1820 = vmatpush1.msra.mxu0 0.0
        %1821 = vmatprep.subr.mxu0 0.0
        %1822 = vmatpush1.msra.mxu0 0.0
        %1823 = vmatprep.subr.mxu0 0.0
        %1824 = vmatpush1.msra.mxu0 0.0
        %1825 = vmatprep.subr.mxu0 0.0
        %1826 = vmatpush1.msra.mxu0 0.0
        %1827 = vmatprep.subr.mxu0 0.0
        %1828 = vmatpush1.msra.mxu0 0.0
        %1829 = vmatprep.subr.mxu0 0.0
        %1830 = vmatpush1.msra.mxu0 0.0
        %1831 = vmatprep.subr.mxu0 0.0
        %1832 = vmatpush1.msra.mxu0 0.0
        %1833 = vmatprep.subr.mxu0 0.0
        %1834 = vmatpush1.msra.mxu0 0.0
        %1835 = vmatprep.subr.mxu0 0.0
        %1836 = vmatpush1.msra.mxu0 0.0
        %1837 = vmatprep.subr.mxu0 0.0
        %1838 = vmatpush1.msra.mxu0 0.0
        %1839 = vmatprep.subr.mxu0 0.0
        %1840 = vmatpush1.msra.mxu0 0.0
        %1841 = vmatprep.subr.mxu0 0.0
        %1842 = vmatpush1.msra.mxu0 0.0
        %1843 = vmatprep.subr.mxu0 0.0
        %1844 = vmatpush1.msra.mxu0 0.0
        %1845 = vmatprep.subr.mxu0 0.0
        %1846 = vmatpush1.msra.mxu0 0.0
        %1847 = vmatprep.subr.mxu0 0.0
        %1848 = vmatpush1.msra.mxu0 0.0
        %1849 = vmatprep.subr.mxu0 0.0
        %1850 = vmatpush1.msra.mxu0 0.0
        %1851 = vmatprep.subr.mxu0 0.0
        %1852 = vmatpush1.msra.mxu0 0.0
        %1853 = vmatprep.subr.mxu0 0.0
        %1854 = vmatpush1.msra.mxu0 0.0
        %1855 = vmatprep.mubr.f32.mxu0 0.0
        %1856 = vmatmul.mubr.f32.gmra.mrb[0].mxu0 %v1784
        %v1857 = vpop.f32.mrb[0].mxu0
        %v1858 = vadd.f32 0.0, %v1857
        %v1859 = vpop.f32.mrb[0].mxu0
        %1860 = vmatprep.mubr.f32.mxu0 0.0
        %1861 = vmatmul.mubr.f32.gmra.mrb[0].mxu0 %v1786
        %v1862 = vpop.f32.mrb[0].mxu0
        %v1863 = vadd.f32 0.0, %v1862
        %v1864 = vpop.f32.mrb[0].mxu0
        %1865 = vdwg.mxu0
        %v1866 = vadd.f32 %v1673, %v1858
        %v1867 = vadd.f32 %v1678, %v1863
        %v1868 = vld [vmem:[%s739] sm:$0xff]
        %v1869 = vld [vmem:[%s739 + $0x8] sm:$0xff]
        %v1870 = vld [vmem:[%s739 + $0x10] sm:$0x3]
        %s1871 = scalar_lea.vmem %s2, 432
        %v1872 = vld [vmem:[%s1871] sm:$0xff]
        %v1873 = vld [vmem:[%s1871 + $0x8] sm:$0xff]
        %v1874 = vld [vmem:[%s1871 + $0x10] sm:$0x3]
        %v1876 = vsel %vm206, %v1868, 0
        %v1879 = vsel %vm206, %v1869, 0
        %v1882 = vsel %vm211, %v1874, 0
        %1884 = vmatprep.subr.mxu0 0.0
        %1885 = vmatpush1.msra.mxu0 %v1872
        %1886 = vmatprep.subr.mxu0 0.0
        %1887 = vmatpush1.msra.mxu0 %v1873
        %1888 = vmatprep.subr.mxu0 0.0
        %1889 = vmatpush1.msra.mxu0 %v1882
        %1890 = vmatprep.subr.mxu0 0.0
        %1891 = vmatpush1.msra.mxu0 0.0
        %1892 = vmatprep.subr.mxu0 0.0
        %1893 = vmatpush1.msra.mxu0 0.0
        %1894 = vmatprep.subr.mxu0 0.0
        %1895 = vmatpush1.msra.mxu0 0.0
        %1896 = vmatprep.subr.mxu0 0.0
        %1897 = vmatpush1.msra.mxu0 0.0
        %1898 = vmatprep.subr.mxu0 0.0
        %1899 = vmatpush1.msra.mxu0 0.0
        %1900 = vmatprep.subr.mxu0 0.0
        %1901 = vmatpush1.msra.mxu0 0.0
        %1902 = vmatprep.subr.mxu0 0.0
        %1903 = vmatpush1.msra.mxu0 0.0
        %1904 = vmatprep.subr.mxu0 0.0
        %1905 = vmatpush1.msra.mxu0 0.0
        %1906 = vmatprep.subr.mxu0 0.0
        %1907 = vmatpush1.msra.mxu0 0.0
        %1908 = vmatprep.subr.mxu0 0.0
        %1909 = vmatpush1.msra.mxu0 0.0
        %1910 = vmatprep.subr.mxu0 0.0
        %1911 = vmatpush1.msra.mxu0 0.0
        %1912 = vmatprep.subr.mxu0 0.0
        %1913 = vmatpush1.msra.mxu0 0.0
        %1914 = vmatprep.subr.mxu0 0.0
        %1915 = vmatpush1.msra.mxu0 0.0
        %1916 = vmatprep.subr.mxu0 0.0
        %1917 = vmatpush1.msra.mxu0 0.0
        %1918 = vmatprep.subr.mxu0 0.0
        %1919 = vmatpush1.msra.mxu0 0.0
        %1920 = vmatprep.subr.mxu0 0.0
        %1921 = vmatpush1.msra.mxu0 0.0
        %1922 = vmatprep.subr.mxu0 0.0
        %1923 = vmatpush1.msra.mxu0 0.0
        %1924 = vmatprep.subr.mxu0 0.0
        %1925 = vmatpush1.msra.mxu0 0.0
        %1926 = vmatprep.subr.mxu0 0.0
        %1927 = vmatpush1.msra.mxu0 0.0
        %1928 = vmatprep.subr.mxu0 0.0
        %1929 = vmatpush1.msra.mxu0 0.0
        %1930 = vmatprep.subr.mxu0 0.0
        %1931 = vmatpush1.msra.mxu0 0.0
        %1932 = vmatprep.subr.mxu0 0.0
        %1933 = vmatpush1.msra.mxu0 0.0
        %1934 = vmatprep.subr.mxu0 0.0
        %1935 = vmatpush1.msra.mxu0 0.0
        %1936 = vmatprep.subr.mxu0 0.0
        %1937 = vmatpush1.msra.mxu0 0.0
        %1938 = vmatprep.subr.mxu0 0.0
        %1939 = vmatpush1.msra.mxu0 0.0
        %1940 = vmatprep.subr.mxu0 0.0
        %1941 = vmatpush1.msra.mxu0 0.0
        %1942 = vmatprep.subr.mxu0 0.0
        %1943 = vmatpush1.msra.mxu0 0.0
        %1944 = vmatprep.subr.mxu0 0.0
        %1945 = vmatpush1.msra.mxu0 0.0
        %1946 = vmatprep.subr.mxu0 0.0
        %1947 = vmatpush1.msra.mxu0 0.0
        %1948 = vmatprep.mubr.f32.mxu0 0.0
        %1949 = vmatmul.mubr.f32.gmra.mrb[0].mxu0 %v1876
        %v1950 = vpop.f32.mrb[0].mxu0
        %v1951 = vadd.f32 0.0, %v1950
        %v1952 = vpop.f32.mrb[0].mxu0
        %1953 = vmatprep.mubr.f32.mxu0 0.0
        %1954 = vmatmul.mubr.f32.gmra.mrb[0].mxu0 %v1879
        %v1955 = vpop.f32.mrb[0].mxu0
        %v1956 = vadd.f32 0.0, %v1955
        %v1957 = vpop.f32.mrb[0].mxu0
        %1958 = vdwg.mxu0
        %v1959 = vadd.f32 %v1773, %v1951
        %v1960 = vadd.f32 %v1774, %v1956
        %s1961 = scalar_lea.vmem %s2, 456
        %v1962 = vld [vmem:[%s1961] sm:$0xff]
        %v1963 = vld [vmem:[%s1961 + $0x8] sm:$0xff]
        %v1964 = vld [vmem:[%s1961 + $0x10] sm:$0x3]
        %v1966 = vrot.slane %v1868, 1
        %v1967 = vrot.slane %v1869, 1
        %v1968 = vsel %vm464, %v1966, %v1967
        %v1969 = vrot.slane %v1870, 1
        %v1970 = vsel %vm464, %v1967, %v1969
        %v1971 = vsel %vm206, %v1968, 0
        %v1973 = vsel %vm206, %v1970, 0
        %v1976 = vsel %vm211, %v1964, 0
        %1978 = vmatprep.subr.mxu0 0.0
        %1979 = vmatpush1.msra.mxu0 %v1962
        %1980 = vmatprep.subr.mxu0 0.0
        %1981 = vmatpush1.msra.mxu0 %v1963
        %1982 = vmatprep.subr.mxu0 0.0
        %1983 = vmatpush1.msra.mxu0 %v1976
        %1984 = vmatprep.subr.mxu0 0.0
        %1985 = vmatpush1.msra.mxu0 0.0
        %1986 = vmatprep.subr.mxu0 0.0
        %1987 = vmatpush1.msra.mxu0 0.0
        %1988 = vmatprep.subr.mxu0 0.0
        %1989 = vmatpush1.msra.mxu0 0.0
        %1990 = vmatprep.subr.mxu0 0.0
        %1991 = vmatpush1.msra.mxu0 0.0
        %1992 = vmatprep.subr.mxu0 0.0
        %1993 = vmatpush1.msra.mxu0 0.0
        %1994 = vmatprep.subr.mxu0 0.0
        %1995 = vmatpush1.msra.mxu0 0.0
        %1996 = vmatprep.subr.mxu0 0.0
        %1997 = vmatpush1.msra.mxu0 0.0
        %1998 = vmatprep.subr.mxu0 0.0
        %1999 = vmatpush1.msra.mxu0 0.0
        %2000 = vmatprep.subr.mxu0 0.0
        %2001 = vmatpush1.msra.mxu0 0.0
        %2002 = vmatprep.subr.mxu0 0.0
        %2003 = vmatpush1.msra.mxu0 0.0
        %2004 = vmatprep.subr.mxu0 0.0
        %2005 = vmatpush1.msra.mxu0 0.0
        %2006 = vmatprep.subr.mxu0 0.0
        %2007 = vmatpush1.msra.mxu0 0.0
        %2008 = vmatprep.subr.mxu0 0.0
        %2009 = vmatpush1.msra.mxu0 0.0
        %2010 = vmatprep.subr.mxu0 0.0
        %2011 = vmatpush1.msra.mxu0 0.0
        %2012 = vmatprep.subr.mxu0 0.0
        %2013 = vmatpush1.msra.mxu0 0.0
        %2014 = vmatprep.subr.mxu0 0.0
        %2015 = vmatpush1.msra.mxu0 0.0
        %2016 = vmatprep.subr.mxu0 0.0
        %2017 = vmatpush1.msra.mxu0 0.0
        %2018 = vmatprep.subr.mxu0 0.0
        %2019 = vmatpush1.msra.mxu0 0.0
        %2020 = vmatprep.subr.mxu0 0.0
        %2021 = vmatpush1.msra.mxu0 0.0
        %2022 = vmatprep.subr.mxu0 0.0
        %2023 = vmatpush1.msra.mxu0 0.0
        %2024 = vmatprep.subr.mxu0 0.0
        %2025 = vmatpush1.msra.mxu0 0.0
        %2026 = vmatprep.subr.mxu0 0.0
        %2027 = vmatpush1.msra.mxu0 0.0
        %2028 = vmatprep.subr.mxu0 0.0
        %2029 = vmatpush1.msra.mxu0 0.0
        %2030 = vmatprep.subr.mxu0 0.0
        %2031 = vmatpush1.msra.mxu0 0.0
        %2032 = vmatprep.subr.mxu0 0.0
        %2033 = vmatpush1.msra.mxu0 0.0
        %2034 = vmatprep.subr.mxu0 0.0
        %2035 = vmatpush1.msra.mxu0 0.0
        %2036 = vmatprep.subr.mxu0 0.0
        %2037 = vmatpush1.msra.mxu0 0.0
        %2038 = vmatprep.subr.mxu0 0.0
        %2039 = vmatpush1.msra.mxu0 0.0
        %2040 = vmatprep.subr.mxu0 0.0
        %2041 = vmatpush1.msra.mxu0 0.0
        %2042 = vmatprep.mubr.f32.mxu0 0.0
        %2043 = vmatmul.mubr.f32.gmra.mrb[0].mxu0 %v1971
        %v2044 = vpop.f32.mrb[0].mxu0
        %v2045 = vadd.f32 0.0, %v2044
        %v2046 = vpop.f32.mrb[0].mxu0
        %2047 = vmatprep.mubr.f32.mxu0 0.0
        %2048 = vmatmul.mubr.f32.gmra.mrb[0].mxu0 %v1973
        %v2049 = vpop.f32.mrb[0].mxu0
        %v2050 = vadd.f32 0.0, %v2049
        %v2051 = vpop.f32.mrb[0].mxu0
        %2052 = vdwg.mxu0
        %v2053 = vadd.f32 %v1866, %v2045
        %v2054 = vadd.f32 %v1867, %v2050
        %s2055 = scalar_lea.vmem %s2, 480
        %v2056 = vld [vmem:[%s2055] sm:$0xff]
        %v2057 = vld [vmem:[%s2055 + $0x8] sm:$0xff]
        %v2058 = vld [vmem:[%s2055 + $0x10] sm:$0x3]
        %v2059 = vrot.slane %v1868, 2
        %v2060 = vrot.slane %v1869, 2
        %v2061 = vsel %vm200, %v2059, %v2060
        %v2062 = vrot.slane %v1870, 2
        %v2063 = vsel %vm200, %v2060, %v2062
        %v2064 = vsel %vm206, %v2061, 0
        %v2066 = vsel %vm206, %v2063, 0
        %v2069 = vsel %vm211, %v2058, 0
        %2071 = vmatprep.subr.mxu0 0.0
        %2072 = vmatpush1.msra.mxu0 %v2056
        %2073 = vmatprep.subr.mxu0 0.0
        %2074 = vmatpush1.msra.mxu0 %v2057
        %2075 = vmatprep.subr.mxu0 0.0
        %2076 = vmatpush1.msra.mxu0 %v2069
        %2077 = vmatprep.subr.mxu0 0.0
        %2078 = vmatpush1.msra.mxu0 0.0
        %2079 = vmatprep.subr.mxu0 0.0
        %2080 = vmatpush1.msra.mxu0 0.0
        %2081 = vmatprep.subr.mxu0 0.0
        %2082 = vmatpush1.msra.mxu0 0.0
        %2083 = vmatprep.subr.mxu0 0.0
        %2084 = vmatpush1.msra.mxu0 0.0
        %2085 = vmatprep.subr.mxu0 0.0
        %2086 = vmatpush1.msra.mxu0 0.0
        %2087 = vmatprep.subr.mxu0 0.0
        %2088 = vmatpush1.msra.mxu0 0.0
        %2089 = vmatprep.subr.mxu0 0.0
        %2090 = vmatpush1.msra.mxu0 0.0
        %2091 = vmatprep.subr.mxu0 0.0
        %2092 = vmatpush1.msra.mxu0 0.0
        %2093 = vmatprep.subr.mxu0 0.0
        %2094 = vmatpush1.msra.mxu0 0.0
        %2095 = vmatprep.subr.mxu0 0.0
        %2096 = vmatpush1.msra.mxu0 0.0
        %2097 = vmatprep.subr.mxu0 0.0
        %2098 = vmatpush1.msra.mxu0 0.0
        %2099 = vmatprep.subr.mxu0 0.0
        %2100 = vmatpush1.msra.mxu0 0.0
        %2101 = vmatprep.subr.mxu0 0.0
        %2102 = vmatpush1.msra.mxu0 0.0
        %2103 = vmatprep.subr.mxu0 0.0
        %2104 = vmatpush1.msra.mxu0 0.0
        %2105 = vmatprep.subr.mxu0 0.0
        %2106 = vmatpush1.msra.mxu0 0.0
        %2107 = vmatprep.subr.mxu0 0.0
        %2108 = vmatpush1.msra.mxu0 0.0
        %2109 = vmatprep.subr.mxu0 0.0
        %2110 = vmatpush1.msra.mxu0 0.0
        %2111 = vmatprep.subr.mxu0 0.0
        %2112 = vmatpush1.msra.mxu0 0.0
        %2113 = vmatprep.subr.mxu0 0.0
        %2114 = vmatpush1.msra.mxu0 0.0
        %2115 = vmatprep.subr.mxu0 0.0
        %2116 = vmatpush1.msra.mxu0 0.0
        %2117 = vmatprep.subr.mxu0 0.0
        %2118 = vmatpush1.msra.mxu0 0.0
        %2119 = vmatprep.subr.mxu0 0.0
        %2120 = vmatpush1.msra.mxu0 0.0
        %2121 = vmatprep.subr.mxu0 0.0
        %2122 = vmatpush1.msra.mxu0 0.0
        %2123 = vmatprep.subr.mxu0 0.0
        %2124 = vmatpush1.msra.mxu0 0.0
        %2125 = vmatprep.subr.mxu0 0.0
        %2126 = vmatpush1.msra.mxu0 0.0
        %2127 = vmatprep.subr.mxu0 0.0
        %2128 = vmatpush1.msra.mxu0 0.0
        %2129 = vmatprep.subr.mxu0 0.0
        %2130 = vmatpush1.msra.mxu0 0.0
        %2131 = vmatprep.subr.mxu0 0.0
        %2132 = vmatpush1.msra.mxu0 0.0
        %2133 = vmatprep.subr.mxu0 0.0
        %2134 = vmatpush1.msra.mxu0 0.0
        %2135 = vmatprep.mubr.f32.mxu0 0.0
        %2136 = vmatmul.mubr.f32.gmra.mrb[0].mxu0 %v2064
        %v2137 = vpop.f32.mrb[0].mxu0
        %v2138 = vadd.f32 0.0, %v2137
        %v2139 = vpop.f32.mrb[0].mxu0
        %2140 = vmatprep.mubr.f32.mxu0 0.0
        %2141 = vmatmul.mubr.f32.gmra.mrb[0].mxu0 %v2066
        %v2142 = vpop.f32.mrb[0].mxu0
        %v2143 = vadd.f32 0.0, %v2142
        %v2144 = vpop.f32.mrb[0].mxu0
        %2145 = vdwg.mxu0
        %v2146 = vadd.f32 %v1959, %v2138
        %v2147 = vadd.f32 %v1960, %v2143
        %v2148 = vld [vmem:[%s1020] sm:$0xff]
        %v2149 = vld [vmem:[%s1020 + $0x8] sm:$0xff]
        %v2150 = vld [vmem:[%s1020 + $0x10] sm:$0x3]
        %s2151 = scalar_lea.vmem %s2, 504
        %v2152 = vld [vmem:[%s2151] sm:$0xff]
        %v2153 = vld [vmem:[%s2151 + $0x8] sm:$0xff]
        %v2154 = vld [vmem:[%s2151 + $0x10] sm:$0x3]
        %v2156 = vsel %vm206, %v2148, 0
        %v2159 = vsel %vm206, %v2149, 0
        %v2162 = vsel %vm211, %v2154, 0
        %2164 = vmatprep.subr.mxu0 0.0
        %2165 = vmatpush1.msra.mxu0 %v2152
        %2166 = vmatprep.subr.mxu0 0.0
        %2167 = vmatpush1.msra.mxu0 %v2153
        %2168 = vmatprep.subr.mxu0 0.0
        %2169 = vmatpush1.msra.mxu0 %v2162
        %2170 = vmatprep.subr.mxu0 0.0
        %2171 = vmatpush1.msra.mxu0 0.0
        %2172 = vmatprep.subr.mxu0 0.0
        %2173 = vmatpush1.msra.mxu0 0.0
        %2174 = vmatprep.subr.mxu0 0.0
        %2175 = vmatpush1.msra.mxu0 0.0
        %2176 = vmatprep.subr.mxu0 0.0
        %2177 = vmatpush1.msra.mxu0 0.0
        %2178 = vmatprep.subr.mxu0 0.0
        %2179 = vmatpush1.msra.mxu0 0.0
        %2180 = vmatprep.subr.mxu0 0.0
        %2181 = vmatpush1.msra.mxu0 0.0
        %2182 = vmatprep.subr.mxu0 0.0
        %2183 = vmatpush1.msra.mxu0 0.0
        %2184 = vmatprep.subr.mxu0 0.0
        %2185 = vmatpush1.msra.mxu0 0.0
        %2186 = vmatprep.subr.mxu0 0.0
        %2187 = vmatpush1.msra.mxu0 0.0
        %2188 = vmatprep.subr.mxu0 0.0
        %2189 = vmatpush1.msra.mxu0 0.0
        %2190 = vmatprep.subr.mxu0 0.0
        %2191 = vmatpush1.msra.mxu0 0.0
        %2192 = vmatprep.subr.mxu0 0.0
        %2193 = vmatpush1.msra.mxu0 0.0
        %2194 = vmatprep.subr.mxu0 0.0
        %2195 = vmatpush1.msra.mxu0 0.0
        %2196 = vmatprep.subr.mxu0 0.0
        %2197 = vmatpush1.msra.mxu0 0.0
        %2198 = vmatprep.subr.mxu0 0.0
        %2199 = vmatpush1.msra.mxu0 0.0
        %2200 = vmatprep.subr.mxu0 0.0
        %2201 = vmatpush1.msra.mxu0 0.0
        %2202 = vmatprep.subr.mxu0 0.0
        %2203 = vmatpush1.msra.mxu0 0.0
        %2204 = vmatprep.subr.mxu0 0.0
        %2205 = vmatpush1.msra.mxu0 0.0
        %2206 = vmatprep.subr.mxu0 0.0
        %2207 = vmatpush1.msra.mxu0 0.0
        %2208 = vmatprep.subr.mxu0 0.0
        %2209 = vmatpush1.msra.mxu0 0.0
        %2210 = vmatprep.subr.mxu0 0.0
        %2211 = vmatpush1.msra.mxu0 0.0
        %2212 = vmatprep.subr.mxu0 0.0
        %2213 = vmatpush1.msra.mxu0 0.0
        %2214 = vmatprep.subr.mxu0 0.0
        %2215 = vmatpush1.msra.mxu0 0.0
        %2216 = vmatprep.subr.mxu0 0.0
        %2217 = vmatpush1.msra.mxu0 0.0
        %2218 = vmatprep.subr.mxu0 0.0
        %2219 = vmatpush1.msra.mxu0 0.0
        %2220 = vmatprep.subr.mxu0 0.0
        %2221 = vmatpush1.msra.mxu0 0.0
        %2222 = vmatprep.subr.mxu0 0.0
        %2223 = vmatpush1.msra.mxu0 0.0
        %2224 = vmatprep.subr.mxu0 0.0
        %2225 = vmatpush1.msra.mxu0 0.0
        %2226 = vmatprep.subr.mxu0 0.0
        %2227 = vmatpush1.msra.mxu0 0.0
        %2228 = vmatprep.mubr.f32.mxu0 0.0
        %2229 = vmatmul.mubr.f32.gmra.mrb[0].mxu0 %v2156
        %v2230 = vpop.f32.mrb[0].mxu0
        %v2231 = vadd.f32 0.0, %v2230
        %v2232 = vpop.f32.mrb[0].mxu0
        %2233 = vmatprep.mubr.f32.mxu0 0.0
        %2234 = vmatmul.mubr.f32.gmra.mrb[0].mxu0 %v2159
        %v2235 = vpop.f32.mrb[0].mxu0
        %v2236 = vadd.f32 0.0, %v2235
        %v2237 = vpop.f32.mrb[0].mxu0
        %2238 = vdwg.mxu0
        %v2239 = vadd.f32 %v2053, %v2231
        %v2240 = vadd.f32 %v2054, %v2236
        %s2241 = scalar_lea.vmem %s2, 528
        %v2242 = vld [vmem:[%s2241] sm:$0xff]
        %v2243 = vld [vmem:[%s2241 + $0x8] sm:$0xff]
        %v2244 = vld [vmem:[%s2241 + $0x10] sm:$0x3]
        %v2246 = vrot.slane %v2148, 1
        %v2247 = vrot.slane %v2149, 1
        %v2248 = vsel %vm464, %v2246, %v2247
        %v2249 = vrot.slane %v2150, 1
        %v2250 = vsel %vm464, %v2247, %v2249
        %v2251 = vsel %vm206, %v2248, 0
        %v2253 = vsel %vm206, %v2250, 0
        %v2256 = vsel %vm211, %v2244, 0
        %2258 = vmatprep.subr.mxu0 0.0
        %2259 = vmatpush1.msra.mxu0 %v2242
        %2260 = vmatprep.subr.mxu0 0.0
        %2261 = vmatpush1.msra.mxu0 %v2243
        %2262 = vmatprep.subr.mxu0 0.0
        %2263 = vmatpush1.msra.mxu0 %v2256
        %2264 = vmatprep.subr.mxu0 0.0
        %2265 = vmatpush1.msra.mxu0 0.0
        %2266 = vmatprep.subr.mxu0 0.0
        %2267 = vmatpush1.msra.mxu0 0.0
        %2268 = vmatprep.subr.mxu0 0.0
        %2269 = vmatpush1.msra.mxu0 0.0
        %2270 = vmatprep.subr.mxu0 0.0
        %2271 = vmatpush1.msra.mxu0 0.0
        %2272 = vmatprep.subr.mxu0 0.0
        %2273 = vmatpush1.msra.mxu0 0.0
        %2274 = vmatprep.subr.mxu0 0.0
        %2275 = vmatpush1.msra.mxu0 0.0
        %2276 = vmatprep.subr.mxu0 0.0
        %2277 = vmatpush1.msra.mxu0 0.0
        %2278 = vmatprep.subr.mxu0 0.0
        %2279 = vmatpush1.msra.mxu0 0.0
        %2280 = vmatprep.subr.mxu0 0.0
        %2281 = vmatpush1.msra.mxu0 0.0
        %2282 = vmatprep.subr.mxu0 0.0
        %2283 = vmatpush1.msra.mxu0 0.0
        %2284 = vmatprep.subr.mxu0 0.0
        %2285 = vmatpush1.msra.mxu0 0.0
        %2286 = vmatprep.subr.mxu0 0.0
        %2287 = vmatpush1.msra.mxu0 0.0
        %2288 = vmatprep.subr.mxu0 0.0
        %2289 = vmatpush1.msra.mxu0 0.0
        %2290 = vmatprep.subr.mxu0 0.0
        %2291 = vmatpush1.msra.mxu0 0.0
        %2292 = vmatprep.subr.mxu0 0.0
        %2293 = vmatpush1.msra.mxu0 0.0
        %2294 = vmatprep.subr.mxu0 0.0
        %2295 = vmatpush1.msra.mxu0 0.0
        %2296 = vmatprep.subr.mxu0 0.0
        %2297 = vmatpush1.msra.mxu0 0.0
        %2298 = vmatprep.subr.mxu0 0.0
        %2299 = vmatpush1.msra.mxu0 0.0
        %2300 = vmatprep.subr.mxu0 0.0
        %2301 = vmatpush1.msra.mxu0 0.0
        %2302 = vmatprep.subr.mxu0 0.0
        %2303 = vmatpush1.msra.mxu0 0.0
        %2304 = vmatprep.subr.mxu0 0.0
        %2305 = vmatpush1.msra.mxu0 0.0
        %2306 = vmatprep.subr.mxu0 0.0
        %2307 = vmatpush1.msra.mxu0 0.0
        %2308 = vmatprep.subr.mxu0 0.0
        %2309 = vmatpush1.msra.mxu0 0.0
        %2310 = vmatprep.subr.mxu0 0.0
        %2311 = vmatpush1.msra.mxu0 0.0
        %2312 = vmatprep.subr.mxu0 0.0
        %2313 = vmatpush1.msra.mxu0 0.0
        %2314 = vmatprep.subr.mxu0 0.0
        %2315 = vmatpush1.msra.mxu0 0.0
        %2316 = vmatprep.subr.mxu0 0.0
        %2317 = vmatpush1.msra.mxu0 0.0
        %2318 = vmatprep.subr.mxu0 0.0
        %2319 = vmatpush1.msra.mxu0 0.0
        %2320 = vmatprep.subr.mxu0 0.0
        %2321 = vmatpush1.msra.mxu0 0.0
        %2322 = vmatprep.mubr.f32.mxu0 0.0
        %2323 = vmatmul.mubr.f32.gmra.mrb[0].mxu0 %v2251
        %v2324 = vpop.f32.mrb[0].mxu0
        %v2325 = vadd.f32 0.0, %v2324
        %v2326 = vpop.f32.mrb[0].mxu0
        %2327 = vmatprep.mubr.f32.mxu0 0.0
        %2328 = vmatmul.mubr.f32.gmra.mrb[0].mxu0 %v2253
        %v2329 = vpop.f32.mrb[0].mxu0
        %v2330 = vadd.f32 0.0, %v2329
        %v2331 = vpop.f32.mrb[0].mxu0
        %2332 = vdwg.mxu0
        %v2333 = vadd.f32 %v2146, %v2325
        %v2334 = vadd.f32 %v2147, %v2330
        %s2335 = scalar_lea.vmem %s2, 552
        %v2336 = vld [vmem:[%s2335] sm:$0xff]
        %v2337 = vld [vmem:[%s2335 + $0x8] sm:$0xff]
        %v2338 = vld [vmem:[%s2335 + $0x10] sm:$0x3]
        %v2339 = vrot.slane %v2148, 2
        %v2340 = vrot.slane %v2149, 2
        %v2341 = vsel %vm200, %v2339, %v2340
        %v2342 = vrot.slane %v2150, 2
        %v2343 = vsel %vm200, %v2340, %v2342
        %v2344 = vsel %vm206, %v2341, 0
        %v2346 = vsel %vm206, %v2343, 0
        %v2349 = vsel %vm211, %v2338, 0
        %2351 = vmatprep.subr.mxu0 0.0
        %2352 = vmatpush1.msra.mxu0 %v2336
        %2353 = vmatprep.subr.mxu0 0.0
        %2354 = vmatpush1.msra.mxu0 %v2337
        %2355 = vmatprep.subr.mxu0 0.0
        %2356 = vmatpush1.msra.mxu0 %v2349
        %2357 = vmatprep.subr.mxu0 0.0
        %2358 = vmatpush1.msra.mxu0 0.0
        %2359 = vmatprep.subr.mxu0 0.0
        %2360 = vmatpush1.msra.mxu0 0.0
        %2361 = vmatprep.subr.mxu0 0.0
        %2362 = vmatpush1.msra.mxu0 0.0
        %2363 = vmatprep.subr.mxu0 0.0
        %2364 = vmatpush1.msra.mxu0 0.0
        %2365 = vmatprep.subr.mxu0 0.0
        %2366 = vmatpush1.msra.mxu0 0.0
        %2367 = vmatprep.subr.mxu0 0.0
        %2368 = vmatpush1.msra.mxu0 0.0
        %2369 = vmatprep.subr.mxu0 0.0
        %2370 = vmatpush1.msra.mxu0 0.0
        %2371 = vmatprep.subr.mxu0 0.0
        %2372 = vmatpush1.msra.mxu0 0.0
        %2373 = vmatprep.subr.mxu0 0.0
        %2374 = vmatpush1.msra.mxu0 0.0
        %2375 = vmatprep.subr.mxu0 0.0
        %2376 = vmatpush1.msra.mxu0 0.0
        %2377 = vmatprep.subr.mxu0 0.0
        %2378 = vmatpush1.msra.mxu0 0.0
        %2379 = vmatprep.subr.mxu0 0.0
        %2380 = vmatpush1.msra.mxu0 0.0
        %2381 = vmatprep.subr.mxu0 0.0
        %2382 = vmatpush1.msra.mxu0 0.0
        %2383 = vmatprep.subr.mxu0 0.0
        %2384 = vmatpush1.msra.mxu0 0.0
        %2385 = vmatprep.subr.mxu0 0.0
        %2386 = vmatpush1.msra.mxu0 0.0
        %2387 = vmatprep.subr.mxu0 0.0
        %2388 = vmatpush1.msra.mxu0 0.0
        %2389 = vmatprep.subr.mxu0 0.0
        %2390 = vmatpush1.msra.mxu0 0.0
        %2391 = vmatprep.subr.mxu0 0.0
        %2392 = vmatpush1.msra.mxu0 0.0
        %2393 = vmatprep.subr.mxu0 0.0
        %2394 = vmatpush1.msra.mxu0 0.0
        %2395 = vmatprep.subr.mxu0 0.0
        %2396 = vmatpush1.msra.mxu0 0.0
        %2397 = vmatprep.subr.mxu0 0.0
        %2398 = vmatpush1.msra.mxu0 0.0
        %2399 = vmatprep.subr.mxu0 0.0
        %2400 = vmatpush1.msra.mxu0 0.0
        %2401 = vmatprep.subr.mxu0 0.0
        %2402 = vmatpush1.msra.mxu0 0.0
        %2403 = vmatprep.subr.mxu0 0.0
        %2404 = vmatpush1.msra.mxu0 0.0
        %2405 = vmatprep.subr.mxu0 0.0
        %2406 = vmatpush1.msra.mxu0 0.0
        %2407 = vmatprep.subr.mxu0 0.0
        %2408 = vmatpush1.msra.mxu0 0.0
        %2409 = vmatprep.subr.mxu0 0.0
        %2410 = vmatpush1.msra.mxu0 0.0
        %2411 = vmatprep.subr.mxu0 0.0
        %2412 = vmatpush1.msra.mxu0 0.0
        %2413 = vmatprep.subr.mxu0 0.0
        %2414 = vmatpush1.msra.mxu0 0.0
        %2415 = vmatprep.mubr.f32.mxu0 0.0
        %2416 = vmatmul.mubr.f32.gmra.mrb[0].mxu0 %v2344
        %v2417 = vpop.f32.mrb[0].mxu0
        %v2418 = vadd.f32 0.0, %v2417
        %v2419 = vpop.f32.mrb[0].mxu0
        %2420 = vmatprep.mubr.f32.mxu0 0.0
        %2421 = vmatmul.mubr.f32.gmra.mrb[0].mxu0 %v2346
        %v2422 = vpop.f32.mrb[0].mxu0
        %v2423 = vadd.f32 0.0, %v2422
        %v2424 = vpop.f32.mrb[0].mxu0
        %2425 = vdwg.mxu0
        %v2426 = vadd.f32 %v2239, %v2418
        %v2427 = vadd.f32 %v2240, %v2423
        %s2428 = sld [smem:[#allocation2 + $0x2]]
        %s2429 = sld [smem:[#allocation2 + $0x3]]
        %v2430 = vadd.f32 %v2333, %v2426
        %v2431 = vadd.f32 %v2334, %v2427
        %v2432 = vstv %s2428
        %v2433 = vmul.f32 %v2430, %v2432
        %v2434 = vmul.f32 %v2431, %v2432
        %v2435 = vstv %s2429
        %v2436 = vadd.f32 %v2433, %v2435
        %v2437 = vadd.f32 %v2434, %v2435
        %v2438 = vmax.f32 %v2436, 0.0
        %v2439 = vmax.f32 %v2437, 0.0
        %s2440 = scalar_lea.vmem %s177, 16 [#allocation5]
        %2441 = vst.msk [vmem:[%s2440] sm:$0xff] %vm1313, %v2438
        %2442 = vst.msk [vmem:[%s2440 + $0x8] sm:$0xff] %vm1313, %v2439
        %s2443 = sand.u32 %s94, 1
        %s2444 = scalar_lea.sflag [#allocation3], %s2443
        %s2445 = sand.u32 %s94, 1
        %s2446 = smul.addr %s2445, 32
        %s2447 = scalar_lea.vmem [#allocation5], %s2446
        // Predicated region
        $region37: #{tpu_custom_call.1} parent=31 // pred_check
          %p2448 = pneg %p104
        $region38: #{tpu_custom_call.1} parent=31 // pred_check_branch
          %2450 = sbr.rel (%p2448) target = $region40
        $region39: #{tpu_custom_call.1} parent=31 // pred_region
          %s2452 = ssub.s32 512, 512
          %2453 = vsyncadd %s2444, %s2452
          %s2454 = smul.addr %s18, 4
          %s2455 = smul.addr %s2454, 128
          %s2456 = scalar_lea.hbm %s3, %s2455
          %s2457 = sshll.u32 %s2447, 4
          %s2458 = int_to_ptr.vmem [resolvable:$true] %s2457
          %2463 = dma.vmem_to_hbm [thread:$0]  %s2458, 512, %s2456, %s2444, 128, 128, 8
        $region40: #{tpu_custom_call.1} parent=31 // pred_fallthru
          _
      $region32: #{tpu_custom_call.1} parent=5 // pred_fallthru
        _
      %p2464 = scmp.le.s32.totalorder 2, %s13
      // Predicated region
      $region41: #{tpu_custom_call.1} parent=5 // pred_check
        %p2465 = pneg %p2464
      $region42: #{tpu_custom_call.1} parent=5 // pred_check_branch
        %2467 = sbr.rel (%p2465) target = $region44
      $region43: #{tpu_custom_call.1} parent=5 // pred_region
        %s2468 = ssub.s32 %s13, 2
        // Predicated region
        $region45: #{tpu_custom_call.1} parent=43 // pred_check
          %p2469 = pneg %p110
        $region46: #{tpu_custom_call.1} parent=43 // pred_check_branch
          %2471 = sbr.rel (%p2469) target = $region48
        $region47: #{tpu_custom_call.1} parent=43 // pred_region
          %s2472 = sand.u32 %s95, 1
          %s2473 = scalar_lea.sflag [#allocation3], %s2472
          %s2474 = sand.u32 %s95, 1
          %s2475 = smul.addr %s2474, 32
          %s2476 = scalar_lea.vmem [#allocation5], %s2475
          %2477 = dma.done %s2473, 512
        $region48: #{tpu_custom_call.1} parent=43 // pred_fallthru
          _
      $region44: #{tpu_custom_call.1} parent=5 // pred_fallthru
        _
    $region6: #{tpu_custom_call.1} parent=1 // loop_footer
      %s17 = sadd.s32 1, %s13
    $region7: #{tpu_custom_call.1} parent=1 // loop_footer_branch
      %12 = sbr.rel target = $region3
    $region8: #{tpu_custom_call.1} parent=1 // loop_exit
      _
    %2478 = vsyncpa [#allocation3], 1
    %s2479 = scalar_lea.sflag [#allocation3], 1
    %2480 = vsyncpa %s2479, 1
    %2481 = vsyncpa [#allocation4], 1
    %s2482 = scalar_lea.sflag [#allocation4], 1
    %2483 = vsyncpa %s2482, 1

</llo_original>
